<compile_context>
chip_gen: v6e
topology: v6e:2x2x1
jax: 0.10.0
libtpu: 0.0.40
codegen_flags: <defaults>
</compile_context>

<pallas_src>
import math
import numpy as np
import jax
import jax.numpy as jnp
from jax.experimental import pallas as pl
from jax.experimental.pallas import tpu as pltpu

CFG = dict(
    embedding_dim=32,
    feature_dim=8,
    max_span_width=4,
    ffnn_size=64,
    ffnn_depth=1,
    dropout=0.0,
    use_features=True,
    model_heads=True,
    use_metadata=True,
    coarse_to_fine=True,
    extract_spans=False,        # top-k span pruning path (reference default)
    top_span_ratio=0.4,
    max_top_antecedents=5,
    coref_depth=2,
    genres=["bc", "bn", "mz"],
)

TILE_SPANS = 128   # span-axis tile for the span-embed + Sm kernel
TILE_M = 128       # row tile for the c2f and pair/Smm/ho kernels


def _round_up(x, n):
    return ((x + n - 1) // n) * n


def _compiler_params():
    return pltpu.CompilerParams(
        dimension_semantics=("parallel",),
        vmem_limit_bytes=48 * 1024 * 1024,
    )


def _bf16(x):
    return x.astype(jnp.bfloat16)


# --------------------------------------------------------------------------
# Kernel 1: fused span embedding (start/end gather + width embed + Sh head
#           attention) + Sm mention-score FFNN.  Gridded over span tiles,
#           tokens stay resident.  Score output is lane-dense (1, ns_pad).
# --------------------------------------------------------------------------
def _span_embed_score_kernel(start_ref, end_ref, tok_ref, wtab_ref,
                             shw_ref, shb_ref, w0_ref, b0_ref, w1_ref, b1_ref,
                             emb_ref, score_ref):
    tokens = tok_ref[...]                                     # (T, E) f32
    t = tokens.shape[0]
    starts = start_ref[...]                                   # (TILE, 1) i32
    ends = end_ref[...]                                       # (TILE, 1) i32
    n = starts.shape[0]

    locs = jax.lax.broadcasted_iota(jnp.int32, (n, t), 1)
    # exact f32 one-hot gathers of the start / end token embeddings
    onehot_s = (locs == starts).astype(jnp.float32)
    onehot_e = (locs == ends).astype(jnp.float32)
    start_e = jnp.dot(onehot_s, tokens, preferred_element_type=jnp.float32)
    end_e = jnp.dot(onehot_e, tokens, preferred_element_type=jnp.float32)

    # span-width embedding via one-hot over the W buckets
    wtab = wtab_ref[...]                                      # (W, F)
    w = wtab.shape[0]
    width = ends - starts
    widx = jax.lax.broadcasted_iota(jnp.int32, (n, w), 1)
    onehot_w = (widx == width).astype(jnp.float32)
    width_e = jnp.dot(onehot_w, wtab, preferred_element_type=jnp.float32)

    # head attention: Sh token scores + masked softmax over the span window
    tok_bf = _bf16(tokens)
    score_row = jax.lax.dot_general(
        _bf16(shw_ref[...]), tok_bf, (((0,), (1,)), ((), ())),
        preferred_element_type=jnp.float32) + shb_ref[...]    # (1, T)
    mask = (locs >= starts) & (locs <= ends)
    logits = score_row + jnp.where(mask, 0.0, -jnp.inf)
    logits = logits - jnp.max(logits, axis=1, keepdims=True)
    e = jnp.exp(logits)
    attn = e * pl.reciprocal(jnp.sum(e, axis=1, keepdims=True), approx=True)
    head_e = jnp.dot(_bf16(attn), tok_bf, preferred_element_type=jnp.float32)

    span_emb = jnp.concatenate([start_e, end_e, width_e, head_e], axis=1)
    emb_ref[...] = span_emb

    # Sm mention score (ffnn_depth = 1, dropout is an eval no-op)
    hidden = jnp.dot(_bf16(span_emb), _bf16(w0_ref[...]),
                     preferred_element_type=jnp.float32) + b0_ref[...]
    hidden = jnp.maximum(hidden, 0.0)
    score = jax.lax.dot_general(
        _bf16(w1_ref[...]), _bf16(hidden), (((0,), (1,)), ((), ())),
        preferred_element_type=jnp.float32) + b1_ref[...]     # (1, TILE)
    score_ref[...] = score


def span_embed_and_score(tokens, starts, ends, wtab, shw, shb, w0, b0, w1, b1,
                         span_dim):
    ns = starts.shape[0]
    ns_pad = _round_up(max(ns, TILE_SPANS), TILE_SPANS)
    pad = ns_pad - ns
    starts_p = jnp.pad(starts[:, None], ((0, pad), (0, 0)))   # pad spans (0,0)
    ends_p = jnp.pad(ends[:, None], ((0, pad), (0, 0)))
    t, e = tokens.shape

    emb, score = pl.pallas_call(
        _span_embed_score_kernel,
        out_shape=(jax.ShapeDtypeStruct((ns_pad, span_dim), jnp.float32),
                   jax.ShapeDtypeStruct((1, ns_pad), jnp.float32)),
        grid=(ns_pad // TILE_SPANS,),
        in_specs=[
            pl.BlockSpec((TILE_SPANS, 1), lambda i: (i, 0)),
            pl.BlockSpec((TILE_SPANS, 1), lambda i: (i, 0)),
            pl.BlockSpec((t, e), lambda i: (0, 0)),
            pl.BlockSpec(wtab.shape, lambda i: (0, 0)),
            pl.BlockSpec(shw.shape, lambda i: (0, 0)),
            pl.BlockSpec(shb.shape, lambda i: (0, 0)),
            pl.BlockSpec(w0.shape, lambda i: (0, 0)),
            pl.BlockSpec(b0.shape, lambda i: (0, 0)),
            pl.BlockSpec(w1.shape, lambda i: (0, 0)),
            pl.BlockSpec(b1.shape, lambda i: (0, 0)),
        ],
        out_specs=(pl.BlockSpec((TILE_SPANS, span_dim), lambda i: (i, 0)),
                   pl.BlockSpec((1, TILE_SPANS), lambda i: (0, i))),
        compiler_params=_compiler_params(),
    )(starts_p, ends_p, tokens, wtab, shw, shb, w0, b0, w1, b1)
    return emb[:ns], score[0, :ns]


# --------------------------------------------------------------------------
# Kernel 2: coarse-to-fine antecedent scores
#           mask + s_i + (c2fP(emb_i) . emb_j), row-tiled, target emb resident.
# --------------------------------------------------------------------------
def _c2f_kernel(embr_ref, embt_ref, mask_ref, score_ref, w_ref, b_ref, o_ref):
    src = jnp.dot(_bf16(embr_ref[...]), _bf16(w_ref[...]),
                  preferred_element_type=jnp.float32) + b_ref[...]
    bil = jax.lax.dot_general(_bf16(src), _bf16(embt_ref[...]),
                              (((1,), (1,)), ((), ())),
                              preferred_element_type=jnp.float32)
    mask_term = jnp.where(mask_ref[...] != 0, 0.0, -jnp.inf)
    o_ref[...] = mask_term + score_ref[...] + bil


def c2f_scores(emb, score_col, mask_i32, c2f_w, c2f_b):
    m, d = emb.shape
    m_pad = _round_up(max(m, TILE_M), TILE_M)
    pad = m_pad - m
    emb_p = jnp.pad(emb, ((0, pad), (0, 0)))
    score_p = jnp.pad(score_col, ((0, pad), (0, 0)))
    mask_p = jnp.pad(mask_i32, ((0, pad), (0, 0)))

    out = pl.pallas_call(
        _c2f_kernel,
        out_shape=jax.ShapeDtypeStruct((m_pad, m), jnp.float32),
        grid=(m_pad // TILE_M,),
        in_specs=[
            pl.BlockSpec((TILE_M, d), lambda i: (i, 0)),
            pl.BlockSpec((m, d), lambda i: (0, 0)),
            pl.BlockSpec((TILE_M, m), lambda i: (i, 0)),
            pl.BlockSpec((TILE_M, 1), lambda i: (i, 0)),
            pl.BlockSpec(c2f_w.shape, lambda i: (0, 0)),
            pl.BlockSpec(c2f_b.shape, lambda i: (0, 0)),
        ],
        out_specs=pl.BlockSpec((TILE_M, m), lambda i: (i, 0)),
        compiler_params=_compiler_params(),
    )(emb_p, emb, mask_p, score_p, c2f_w, c2f_b)
    return out[:m]


# --------------------------------------------------------------------------
# Kernel 3: fused per-depth update.  For each span row block:
#   gather emb_j in-kernel (one-hot matmul), build the Smm input implicitly
#   via split weights (no concat / no (m*k, mm_dim) HBM tensor), combine fast
#   + slow scores, softmax over k antecedents + dummy, attend, hoP gate update.
# --------------------------------------------------------------------------
def _make_pair_ho_kernel(k, f3):
    def kernel(embr_ref, emball_ref, idx_ref, fast_ref, pair_ref,
               w0i_ref, w0j_ref, w0p_ref, w0f_ref, b0_ref, w1_ref, b1_ref,
               wha_ref, whb_ref, bh_ref, emb_out_ref, score_out_ref):
        emb_i = embr_ref[...]                                 # (TILE, D)
        emb_all = emball_ref[...]                             # (m_pad, D)
        idx_all = idx_ref[...]                                # (TILE, k) i32
        fast = fast_ref[...]                                  # (TILE, k)
        pair = pair_ref[...]                                  # (TILE, k*3F)
        n = emb_i.shape[0]
        mcols = emb_all.shape[0]

        proj_i = jnp.dot(_bf16(emb_i), _bf16(w0i_ref[...]),
                         preferred_element_type=jnp.float32)  # (TILE, H)
        b0 = b0_ref[...]
        col_iota = jax.lax.broadcasted_iota(jnp.int32, (n, mcols), 1)

        scores = []
        emb_js = []
        for j in range(k):
            idx_j = idx_all[:, j:j + 1]
            onehot = (col_iota == idx_j).astype(jnp.float32)
            emb_j = jnp.dot(onehot, emb_all,
                            preferred_element_type=jnp.float32)   # exact gather
            prod = emb_i * emb_j
            feat_j = pair[:, j * f3:(j + 1) * f3]
            h = (proj_i
                 + jnp.dot(_bf16(emb_j), _bf16(w0j_ref[...]),
                           preferred_element_type=jnp.float32)
                 + jnp.dot(_bf16(prod), _bf16(w0p_ref[...]),
                           preferred_element_type=jnp.float32)
                 + jnp.dot(_bf16(feat_j), _bf16(w0f_ref[...]),
                           preferred_element_type=jnp.float32)
                 + b0)
            h = jnp.maximum(h, 0.0)
            slow = jnp.dot(_bf16(h), _bf16(w1_ref[...]),
                           preferred_element_type=jnp.float32) + b1_ref[...]
            scores.append(fast[:, j:j + 1] + slow)            # (TILE, 1)
            emb_js.append(emb_j)

        # softmax over k antecedents + dummy slot (score 0, emb = current span)
        mx = jnp.zeros_like(scores[0])
        for s in scores:
            mx = jnp.maximum(mx, s)
        den = jnp.exp(-mx)                                    # dummy weight
        att = den * emb_i
        for s, ej in zip(scores, emb_js):
            wgt = jnp.exp(s - mx)
            den = den + wgt
            att = att + wgt * ej
        attended = att * pl.reciprocal(den, approx=True)

        # hoP gate, weights split so no 2*D concatenation is needed
        gate = jax.nn.sigmoid(
            jnp.dot(_bf16(emb_i), _bf16(wha_ref[...]),
                    preferred_element_type=jnp.float32)
            + jnp.dot(_bf16(attended), _bf16(whb_ref[...]),
                      preferred_element_type=jnp.float32)
            + bh_ref[...])
        emb_out_ref[...] = gate * attended + (1.0 - gate) * emb_i

        for j in range(k):
            score_out_ref[:, j:j + 1] = scores[j]
        score_out_ref[:, k:k + 1] = jnp.zeros((n, 1), jnp.float32)
    return kernel


def pair_smm_ho(kernel_fn, top_emb, ante_idx_p, fast_p, pair_p, wts, m, k, f3):
    d = top_emb.shape[1]
    m_pad = ante_idx_p.shape[0]
    pad = m_pad - m
    emb_p = jnp.pad(top_emb, ((0, pad), (0, 0)))

    new_emb, score_full = pl.pallas_call(
        kernel_fn,
        out_shape=(jax.ShapeDtypeStruct((m_pad, d), jnp.float32),
                   jax.ShapeDtypeStruct((m_pad, k + 1), jnp.float32)),
        grid=(m_pad // TILE_M,),
        in_specs=[
            pl.BlockSpec((TILE_M, d), lambda i: (i, 0)),
            pl.BlockSpec((m_pad, d), lambda i: (0, 0)),
            pl.BlockSpec((TILE_M, k), lambda i: (i, 0)),
            pl.BlockSpec((TILE_M, k), lambda i: (i, 0)),
            pl.BlockSpec((TILE_M, k * f3), lambda i: (i, 0)),
            pl.BlockSpec(wts['w0i'].shape, lambda i: (0, 0)),
            pl.BlockSpec(wts['w0j'].shape, lambda i: (0, 0)),
            pl.BlockSpec(wts['w0p'].shape, lambda i: (0, 0)),
            pl.BlockSpec(wts['w0f'].shape, lambda i: (0, 0)),
            pl.BlockSpec(wts['b0'].shape, lambda i: (0, 0)),
            pl.BlockSpec(wts['w1'].shape, lambda i: (0, 0)),
            pl.BlockSpec(wts['b1'].shape, lambda i: (0, 0)),
            pl.BlockSpec(wts['wha'].shape, lambda i: (0, 0)),
            pl.BlockSpec(wts['whb'].shape, lambda i: (0, 0)),
            pl.BlockSpec(wts['bh'].shape, lambda i: (0, 0)),
        ],
        out_specs=(pl.BlockSpec((TILE_M, d), lambda i: (i, 0)),
                   pl.BlockSpec((TILE_M, k + 1), lambda i: (i, 0))),
        compiler_params=_compiler_params(),
    )(emb_p, emb_p, ante_idx_p, fast_p, pair_p,
      wts['w0i'], wts['w0j'], wts['w0p'], wts['w0f'], wts['b0'],
      wts['w1'], wts['b1'], wts['wha'], wts['whb'], wts['bh'])
    return new_emb[:m], score_full[:m]


# ------------------------------- parameters --------------------------------

def init_params(cfg, key):
    E = cfg['embedding_dim']
    F = cfg['feature_dim']
    span_dim = 2 * E + F + E                       # use_features + model_heads
    mm_dim = 3 * span_dim + F + 2 * F              # features + metadata
    ks = jax.random.split(key, 11)

    def lin(k, din, dout, scale=0.1):
        kw, kb = jax.random.split(k)
        return (jax.random.normal(kw, (din, dout), jnp.float32) * scale,
                jax.random.normal(kb, (1, dout), jnp.float32) * scale)

    p = {}
    p['span_width_emb'] = jax.random.normal(ks[0], (cfg['max_span_width'], F), jnp.float32) * 0.1
    p['bucket_dist_emb'] = jax.random.normal(ks[1], (10, F), jnp.float32) * 0.1
    p['genre_emb'] = jax.random.normal(ks[2], (len(cfg['genres']) + 1, F), jnp.float32) * 0.1
    p['same_speaker_emb'] = jax.random.normal(ks[3], (2, F), jnp.float32) * 0.1
    p['sh_w'], p['sh_b'] = lin(ks[4], E, 1)
    p['sm_w0'], p['sm_b0'] = lin(ks[5], span_dim, cfg['ffnn_size'])
    p['sm_w1'], p['sm_b1'] = lin(ks[6], cfg['ffnn_size'], 1)
    p['smm_w0'], p['smm_b0'] = lin(ks[7], mm_dim, cfg['ffnn_size'])
    p['smm_w1'], p['smm_b1'] = lin(ks[8], cfg['ffnn_size'], 1)
    p['c2f_w'], p['c2f_b'] = lin(ks[9], span_dim, span_dim)
    p['ho_w'], p['ho_b'] = lin(ks[10], 2 * span_dim, span_dim)
    return p, span_dim, mm_dim


def bucket_distance(d):
    # [0,1,2,3,4,5-7,8-15,16-31,32-63,64+]
    fd = d.astype(jnp.float32)
    logd = jnp.floor(jnp.log(jnp.maximum(fd, 1.0)) / math.log(2.0)) + 3.0
    combined = jnp.where(d <= 4, fd, logd)
    return jnp.clip(combined, 0.0, 9.0).astype(jnp.int32)


# -------------------------------- forward ----------------------------------

def coref_forward(params, cfg, tokens_embed, sentence_map, speaker_ids, genre):
    F = cfg['feature_dim']
    T = tokens_embed.shape[0]
    W = cfg['max_span_width']
    flat_sent = np.asarray(sentence_map, dtype=np.int64)
    flat_spk = jnp.asarray(np.asarray(speaker_ids, dtype=np.int32))

    # candidate span enumeration (pure metadata -> host, as in the reference)
    cand_start = np.tile(np.arange(T)[:, None], (1, W))
    cand_end = cand_start + np.arange(W)[None, :]
    start_sent = flat_sent[cand_start]
    end_sent = flat_sent[np.minimum(cand_end, T - 1)]
    cmask = (cand_end < T) & (start_sent == end_sent)
    spans_start = jnp.asarray(cand_start[cmask].astype(np.int32))
    spans_end = jnp.asarray(cand_end[cmask].astype(np.int32))
    ns = int(spans_start.shape[0])

    # fused span embedding + Sm mention scores (single gridded kernel)
    spans_embed, spans_score = span_embed_and_score(
        tokens_embed, spans_start, spans_end,
        params['span_width_emb'], params['sh_w'], params['sh_b'],
        params['sm_w0'], params['sm_b0'], params['sm_w1'], params['sm_b1'],
        spans_embed_dim := (params['sm_w0'].shape[0]))

    # top-m span pruning fully on device (extract_spans=False path):
    # same selected set as the reference topk + boolean mask (document order).
    m = min(int(cfg['top_span_ratio'] * T), ns)
    _, top_idx = jax.lax.top_k(spans_score, m)
    sel = jnp.sort(top_idx)

    top_emb = spans_embed[sel]
    top_score = spans_score[sel][:, None]
    top_start = spans_start[sel]
    top_end = spans_end[sel]

    s_i, s_j = top_start[:, None], top_start[None, :]
    e_i, e_j = top_end[:, None], top_end[None, :]
    top_masks = (s_i > s_j) | ((s_i == s_j) & (e_i > e_j))            # (m, m)

    top_spk = flat_spk[top_start]
    genre_emb = params['genre_emb'][genre]

    k = min(cfg['max_top_antecedents'], m)

    # coarse-to-fine pruning (gridded kernel) + device top-k
    all_score = c2f_scores(top_emb, top_score, top_masks.astype(jnp.int32),
                           params['c2f_w'], params['c2f_b'])
    fast_score, ante_idx = jax.lax.top_k(all_score, k)                # (m, k)
    offsets = jnp.arange(m)[:, None] - jnp.arange(m)[None, :]
    ante_off = jnp.take_along_axis(offsets.astype(jnp.int32), ante_idx, axis=1)

    # loop-invariant pair features (distance / same-speaker / genre)
    dist_emb = params['bucket_dist_emb'][bucket_distance(ante_off)]   # (m,k,F)
    same_spk = (top_spk[:, None] == top_spk[ante_idx]).astype(jnp.int32)
    spk_emb = params['same_speaker_emb'][same_spk]                    # (m,k,F)
    genre_b = jnp.broadcast_to(genre_emb[None, None, :], (m, k, F))
    pair_feat = jnp.concatenate([dist_emb, spk_emb, genre_b],
                                axis=2).reshape(m, k * 3 * F)

    m_pad = _round_up(max(m, TILE_M), TILE_M)
    pad = m_pad - m
    ante_idx_p = jnp.pad(ante_idx, ((0, pad), (0, 0)))
    fast_p = jnp.pad(fast_score, ((0, pad), (0, 0)))
    pair_p = jnp.pad(pair_feat, ((0, pad), (0, 0)))

    D = top_emb.shape[1]
    w0 = params['smm_w0']
    wts = dict(
        w0i=w0[:D], w0j=w0[D:2 * D], w0p=w0[2 * D:3 * D], w0f=w0[3 * D:],
        b0=params['smm_b0'], w1=params['smm_w1'], b1=params['smm_b1'],
        wha=params['ho_w'][:D], whb=params['ho_w'][D:], bh=params['ho_b'])

    kernel_fn = _make_pair_ho_kernel(k, 3 * F)
    ante_score_full = None
    for _ in range(cfg['coref_depth']):
        top_emb, ante_score_full = pair_smm_ho(
            kernel_fn, top_emb, ante_idx_p, fast_p, pair_p, wts, m, k, 3 * F)

    return ante_score_full, ante_idx, top_masks, top_start, top_end


# ---------------------------------- main ------------------------------------

if __name__ == "__main__":
    key = jax.random.PRNGKey(0)
    k_p, k_tok = jax.random.split(key)
    params, span_dim, mm_dim = init_params(CFG, k_p)

    num_sentence, max_len = 2, 16
    E = CFG['embedding_dim']
    # TODO(synk): the external `transformer_model` encoder is out of scope; its
    # output embeddings are synthesized deterministically here.
    sentences_embed = jax.random.normal(k_tok, (num_sentence, max_len, E), jnp.float32)
    valid_mask = np.ones((num_sentence, max_len), dtype=bool)
    tokens_embed = sentences_embed.reshape(-1, E)[np.nonzero(valid_mask.reshape(-1))[0]]

    sentence_map = [0] * max_len + [1] * max_len
    speaker_ids = ([0] * 8 + [1] * 8) + ([1] * 8 + [0] * 8)
    genre = 1

    outs = coref_forward(params, CFG, tokens_embed, sentence_map, speaker_ids, genre)
    outs = jax.block_until_ready(outs)
    print("KERNEL_OK")
</pallas_src>

<mosaic_0001>
module attributes {stable_mosaic.version = 11 : i64} {
  func.func @_span_embed_score_kernel(%arg0: i32, %arg1: memref<128x1xi32, #tpu.memory_space<vmem>>, %arg2: memref<128x1xi32, #tpu.memory_space<vmem>>, %arg3: memref<32x32xf32, #tpu.memory_space<vmem>>, %arg4: memref<4x8xf32, #tpu.memory_space<vmem>>, %arg5: memref<32x1xf32, #tpu.memory_space<vmem>>, %arg6: memref<1x1xf32, #tpu.memory_space<vmem>>, %arg7: memref<104x64xf32, #tpu.memory_space<vmem>>, %arg8: memref<1x64xf32, #tpu.memory_space<vmem>>, %arg9: memref<64x1xf32, #tpu.memory_space<vmem>>, %arg10: memref<1x1xf32, #tpu.memory_space<vmem>>, %arg11: memref<128x104xf32, #tpu.memory_space<vmem>>, %arg12: memref<1x128xf32, #tpu.memory_space<vmem>>) attributes {dimension_semantics = [#tpu.dimension_semantics<parallel>], iteration_bounds = array<i64: 1>, scalar_prefetch = 0 : i64, scratch_operands = 0 : i64, tpu.core_type = #tpu.core_type<tc>, window_params = [{transform_indices = @transform_0, window_bounds = array<i64: 128, 1>}, {transform_indices = @transform_1, window_bounds = array<i64: 128, 1>}, {pipeline_mode = #tpu.pipeline_mode<synchronous>, transform_indices = @transform_2, window_bounds = array<i64: 32, 32>}, {pipeline_mode = #tpu.pipeline_mode<synchronous>, transform_indices = @transform_3, window_bounds = array<i64: 4, 8>}, {pipeline_mode = #tpu.pipeline_mode<synchronous>, transform_indices = @transform_4, window_bounds = array<i64: 32, 1>}, {pipeline_mode = #tpu.pipeline_mode<synchronous>, transform_indices = @transform_5, window_bounds = array<i64: 1, 1>}, {pipeline_mode = #tpu.pipeline_mode<synchronous>, transform_indices = @transform_6, window_bounds = array<i64: 104, 64>}, {pipeline_mode = #tpu.pipeline_mode<synchronous>, transform_indices = @transform_7, window_bounds = array<i64: 1, 64>}, {pipeline_mode = #tpu.pipeline_mode<synchronous>, transform_indices = @transform_8, window_bounds = array<i64: 64, 1>}, {pipeline_mode = #tpu.pipeline_mode<synchronous>, transform_indices = @transform_9, window_bounds = array<i64: 1, 1>}, {transform_indices = @transform_10, window_bounds = array<i64: 128, 104>}, {transform_indices = @transform_11, window_bounds = array<i64: 1, 128>}]} {
    %c0 = arith.constant 0 : index
    %c0_0 = arith.constant 0 : index
    %0 = vector.load %arg3[%c0, %c0_0] : memref<32x32xf32, #tpu.memory_space<vmem>>, vector<32x32xf32>
    %c0_1 = arith.constant 0 : index
    %c0_2 = arith.constant 0 : index
    %1 = vector.load %arg1[%c0_1, %c0_2] : memref<128x1xi32, #tpu.memory_space<vmem>>, vector<128x1xi32>
    %c0_3 = arith.constant 0 : index
    %c0_4 = arith.constant 0 : index
    %2 = vector.load %arg2[%c0_3, %c0_4] : memref<128x1xi32, #tpu.memory_space<vmem>>, vector<128x1xi32>
    %3 = tpu.iota {dimensions = array<i32: 1>} : vector<128x32xi32>
    %4 = vector.broadcast %1 : vector<128x1xi32> to vector<128x32xi32>
    %5 = arith.cmpi eq, %3, %4 : vector<128x32xi32>
    %6 = arith.extui %5 : vector<128x32xi1> to vector<128x32xi32>
    %7 = arith.sitofp %6 : vector<128x32xi32> to vector<128x32xf32>
    %8 = vector.broadcast %2 : vector<128x1xi32> to vector<128x32xi32>
    %9 = arith.cmpi eq, %3, %8 : vector<128x32xi32>
    %10 = arith.extui %9 : vector<128x32xi1> to vector<128x32xi32>
    %11 = arith.sitofp %10 : vector<128x32xi32> to vector<128x32xf32>
    %cst = arith.constant dense<0.000000e+00> : vector<128x32xf32>
    %12 = tpu.matmul %7, %0, %cst {dimension_numbers = #tpu.dot_dimension_numbers<[1], [0], [0], [1], [0, 0, 1, 1], [], []>} : vector<128x32xf32>, vector<32x32xf32>, vector<128x32xf32> -> vector<128x32xf32>
    %cst_5 = arith.constant dense<0.000000e+00> : vector<128x32xf32>
    %13 = tpu.matmul %11, %0, %cst_5 {dimension_numbers = #tpu.dot_dimension_numbers<[1], [0], [0], [1], [0, 0, 1, 1], [], []>} : vector<128x32xf32>, vector<32x32xf32>, vector<128x32xf32> -> vector<128x32xf32>
    %c0_6 = arith.constant 0 : index
    %c0_7 = arith.constant 0 : index
    %14 = vector.load %arg4[%c0_6, %c0_7] : memref<4x8xf32, #tpu.memory_space<vmem>>, vector<4x8xf32>
    %15 = arith.subi %2, %1 : vector<128x1xi32>
    %16 = tpu.iota {dimensions = array<i32: 1>} : vector<128x4xi32>
    %17 = vector.broadcast %15 : vector<128x1xi32> to vector<128x4xi32>
    %18 = arith.cmpi eq, %16, %17 : vector<128x4xi32>
    %19 = arith.extui %18 : vector<128x4xi1> to vector<128x4xi32>
    %20 = arith.sitofp %19 : vector<128x4xi32> to vector<128x4xf32>
    %cst_8 = arith.constant dense<0.000000e+00> : vector<128x8xf32>
    %21 = tpu.matmul %20, %14, %cst_8 {dimension_numbers = #tpu.dot_dimension_numbers<[1], [0], [0], [1], [0, 0, 1, 1], [], []>} : vector<128x4xf32>, vector<4x8xf32>, vector<128x8xf32> -> vector<128x8xf32>
    %22 = arith.truncf %0 : vector<32x32xf32> to vector<32x32xbf16>
    %c0_9 = arith.constant 0 : index
    %c0_10 = arith.constant 0 : index
    %23 = vector.load %arg5[%c0_9, %c0_10] : memref<32x1xf32, #tpu.memory_space<vmem>>, vector<32x1xf32>
    %24 = arith.truncf %23 : vector<32x1xf32> to vector<32x1xbf16>
    %cst_11 = arith.constant dense<0.000000e+00> : vector<1x32xf32>
    %25 = tpu.matmul %24, %22, %cst_11 {dimension_numbers = #tpu.dot_dimension_numbers<[0], [1], [1], [0], [0, 1, 1, 0], [], []>} : vector<32x1xbf16>, vector<32x32xbf16>, vector<1x32xf32> -> vector<1x32xf32>
    %c0_12 = arith.constant 0 : index
    %c0_13 = arith.constant 0 : index
    %26 = vector.load %arg6[%c0_12, %c0_13] : memref<1x1xf32, #tpu.memory_space<vmem>>, vector<1x1xf32>
    %27 = vector.broadcast %26 : vector<1x1xf32> to vector<1x32xf32>
    %28 = arith.addf %25, %27 : vector<1x32xf32>
    %29 = vector.broadcast %1 : vector<128x1xi32> to vector<128x32xi32>
    %30 = arith.cmpi sge, %3, %29 : vector<128x32xi32>
    %31 = vector.broadcast %2 : vector<128x1xi32> to vector<128x32xi32>
    %32 = arith.cmpi sle, %3, %31 : vector<128x32xi32>
    %33 = arith.andi %30, %32 : vector<128x32xi1>
    %cst_14 = arith.constant 0.000000e+00 : f32
    %cst_15 = arith.constant 0xFF800000 : f32
    %34 = vector.broadcast %cst_14 : f32 to vector<128x32xf32>
    %35 = vector.broadcast %cst_15 : f32 to vector<128x32xf32>
    %36 = arith.select %33, %34, %35 : vector<128x32xi1>, vector<128x32xf32>
    %37 = vector.broadcast %28 : vector<1x32xf32> to vector<128x32xf32>
    %38 = arith.addf %37, %36 : vector<128x32xf32>
    %cst_16 = arith.constant dense<0xFF800000> : vector<128xf32>
    %39 = vector.multi_reduction <maximumf>, %38, %cst_16 [1] : vector<128x32xf32> to vector<128xf32>
    %40 = vector.shape_cast %39 : vector<128xf32> to vector<128x1xf32>
    %41 = vector.broadcast %40 : vector<128x1xf32> to vector<128x32xf32>
    %42 = arith.subf %38, %41 : vector<128x32xf32>
    %43 = math.exp %42 : vector<128x32xf32>
    %cst_17 = arith.constant dense<0.000000e+00> : vector<128xf32>
    %44 = vector.multi_reduction <add>, %43, %cst_17 [1] : vector<128x32xf32> to vector<128xf32>
    %45 = vector.shape_cast %44 : vector<128xf32> to vector<128x1xf32>
    %46 = tpu.reciprocal %45 {approx = true} : vector<128x1xf32> -> vector<128x1xf32>
    %47 = vector.broadcast %46 : vector<128x1xf32> to vector<128x32xf32>
    %48 = arith.mulf %43, %47 : vector<128x32xf32>
    %49 = arith.truncf %48 : vector<128x32xf32> to vector<128x32xbf16>
    %cst_18 = arith.constant dense<0.000000e+00> : vector<128x32xf32>
    %50 = tpu.matmul %49, %22, %cst_18 {dimension_numbers = #tpu.dot_dimension_numbers<[1], [0], [0], [1], [0, 0, 1, 1], [], []>} : vector<128x32xbf16>, vector<32x32xbf16>, vector<128x32xf32> -> vector<128x32xf32>
    %51 = tpu.concatenate %12, %13, %21, %50 in 1 : vector<128x32xf32>, vector<128x32xf32>, vector<128x8xf32>, vector<128x32xf32> -> vector<128x104xf32>
    %c0_19 = arith.constant 0 : index
    %c0_20 = arith.constant 0 : index
    %52 = vector.load %arg11[%c0_19, %c0_20] : memref<128x104xf32, #tpu.memory_space<vmem>>, vector<128x104xf32>
    tpu.vector_store %arg11[%c0_19, %c0_20], %51 {strides = array<i32>} : memref<128x104xf32, #tpu.memory_space<vmem>>, vector<128x104xf32>,
    %53 = arith.truncf %51 : vector<128x104xf32> to vector<128x104xbf16>
    %c0_21 = arith.constant 0 : index
    %c0_22 = arith.constant 0 : index
    %54 = vector.load %arg7[%c0_21, %c0_22] : memref<104x64xf32, #tpu.memory_space<vmem>>, vector<104x64xf32>
    %55 = arith.truncf %54 : vector<104x64xf32> to vector<104x64xbf16>
    %cst_23 = arith.constant dense<0.000000e+00> : vector<128x64xf32>
    %56 = tpu.matmul %53, %55, %cst_23 {dimension_numbers = #tpu.dot_dimension_numbers<[1], [0], [0], [1], [0, 0, 1, 1], [], []>} : vector<128x104xbf16>, vector<104x64xbf16>, vector<128x64xf32> -> vector<128x64xf32>
    %c0_24 = arith.constant 0 : index
    %c0_25 = arith.constant 0 : index
    %57 = vector.load %arg8[%c0_24, %c0_25] : memref<1x64xf32, #tpu.memory_space<vmem>>, vector<1x64xf32>
    %58 = vector.broadcast %57 : vector<1x64xf32> to vector<128x64xf32>
    %59 = arith.addf %56, %58 : vector<128x64xf32>
    %cst_26 = arith.constant 0.000000e+00 : f32
    %60 = vector.broadcast %cst_26 : f32 to vector<128x64xf32>
    %61 = arith.maximumf %59, %60 : vector<128x64xf32>
    %c0_27 = arith.constant 0 : index
    %c0_28 = arith.constant 0 : index
    %62 = vector.load %arg9[%c0_27, %c0_28] : memref<64x1xf32, #tpu.memory_space<vmem>>, vector<64x1xf32>
    %63 = arith.truncf %62 : vector<64x1xf32> to vector<64x1xbf16>
    %64 = arith.truncf %61 : vector<128x64xf32> to vector<128x64xbf16>
    %cst_29 = arith.constant dense<0.000000e+00> : vector<1x128xf32>
    %65 = tpu.matmul %63, %64, %cst_29 {dimension_numbers = #tpu.dot_dimension_numbers<[0], [1], [1], [0], [0, 1, 1, 0], [], []>} : vector<64x1xbf16>, vector<128x64xbf16>, vector<1x128xf32> -> vector<1x128xf32>
    %c0_30 = arith.constant 0 : index
    %c0_31 = arith.constant 0 : index
    %66 = vector.load %arg10[%c0_30, %c0_31] : memref<1x1xf32, #tpu.memory_space<vmem>>, vector<1x1xf32>
    %67 = vector.broadcast %66 : vector<1x1xf32> to vector<1x128xf32>
    %68 = arith.addf %65, %67 : vector<1x128xf32>
    %c0_32 = arith.constant 0 : index
    %c0_33 = arith.constant 0 : index
    %69 = vector.load %arg12[%c0_32, %c0_33] : memref<1x128xf32, #tpu.memory_space<vmem>>, vector<1x128xf32>
    tpu.vector_store %arg12[%c0_32, %c0_33], %68 {strides = array<i32>} : memref<1x128xf32, #tpu.memory_space<vmem>>, vector<1x128xf32>,
    return
  }
  func.func @transform_0(%arg0: i32) -> (i32, i32) {
    %c0_i32 = arith.constant 0 : i32
    %c0_i32_0 = arith.constant 0 : i32
    return %arg0, %c0_i32 : i32, i32
  }
  func.func @transform_1(%arg0: i32) -> (i32, i32) {
    %c0_i32 = arith.constant 0 : i32
    %c0_i32_0 = arith.constant 0 : i32
    return %arg0, %c0_i32 : i32, i32
  }
  func.func @transform_2(%arg0: i32) -> (i32, i32) {
    %c0_i32 = arith.constant 0 : i32
    %c0_i32_0 = arith.constant 0 : i32
    %c0_i32_1 = arith.constant 0 : i32
    return %c0_i32, %c0_i32_0 : i32, i32
  }
  func.func @transform_3(%arg0: i32) -> (i32, i32) {
    %c0_i32 = arith.constant 0 : i32
    %c0_i32_0 = arith.constant 0 : i32
    %c0_i32_1 = arith.constant 0 : i32
    return %c0_i32, %c0_i32_0 : i32, i32
  }
  func.func @transform_4(%arg0: i32) -> (i32, i32) {
    %c0_i32 = arith.constant 0 : i32
    %c0_i32_0 = arith.constant 0 : i32
    %c0_i32_1 = arith.constant 0 : i32
    return %c0_i32, %c0_i32_0 : i32, i32
  }
  func.func @transform_5(%arg0: i32) -> (i32, i32) {
    %c0_i32 = arith.constant 0 : i32
    %c0_i32_0 = arith.constant 0 : i32
    %c0_i32_1 = arith.constant 0 : i32
    return %c0_i32, %c0_i32_0 : i32, i32
  }
  func.func @transform_6(%arg0: i32) -> (i32, i32) {
    %c0_i32 = arith.constant 0 : i32
    %c0_i32_0 = arith.constant 0 : i32
    %c0_i32_1 = arith.constant 0 : i32
    return %c0_i32, %c0_i32_0 : i32, i32
  }
  func.func @transform_7(%arg0: i32) -> (i32, i32) {
    %c0_i32 = arith.constant 0 : i32
    %c0_i32_0 = arith.constant 0 : i32
    %c0_i32_1 = arith.constant 0 : i32
    return %c0_i32, %c0_i32_0 : i32, i32
  }
  func.func @transform_8(%arg0: i32) -> (i32, i32) {
    %c0_i32 = arith.constant 0 : i32
    %c0_i32_0 = arith.constant 0 : i32
    %c0_i32_1 = arith.constant 0 : i32
    return %c0_i32, %c0_i32_0 : i32, i32
  }
  func.func @transform_9(%arg0: i32) -> (i32, i32) {
    %c0_i32 = arith.constant 0 : i32
    %c0_i32_0 = arith.constant 0 : i32
    %c0_i32_1 = arith.constant 0 : i32
    return %c0_i32, %c0_i32_0 : i32, i32
  }
  func.func @transform_10(%arg0: i32) -> (i32, i32) {
    %c0_i32 = arith.constant 0 : i32
    %c0_i32_0 = arith.constant 0 : i32
    return %arg0, %c0_i32 : i32, i32
  }
  func.func @transform_11(%arg0: i32) -> (i32, i32) {
    %c0_i32 = arith.constant 0 : i32
    %c0_i32_0 = arith.constant 0 : i32
    return %c0_i32, %arg0 : i32, i32
  }
}

</mosaic_0001>

<llo_original>
// kernel: tpu_custom_call.1
$region0: #{tpu_custom_call.1}
  #allocation0 [shape = 'u32[]', space=smem, size = 0x4, offset = 0x4, fixed_abs, tag = 'smem constant byte address 0x4 - core index']
  #allocation1 [shape = 'u32[144,128]{1,0:T(1,128)}', space=vmem, size = 0x12000, scoped, tag = 'internal scratch']
  #allocation2 [shape = 'f32[1,1]{1,0:T(1,128)S(1)}', space=vmem, size = 0x200, scoped, tag = 'scoped memory for tpu_custom_call.1']
  #allocation3 [shape = 'f32[1,1]{1,0:T(1,128)S(1)}', space=vmem, size = 0x200, scoped, tag = 'scoped memory for tpu_custom_call.1']
  %s0 = inlined_call_operand.vmem [shape: s32[128,1], index: 0, kind: input, shape index: {}]
  %s1 = inlined_call_operand.vmem [shape: s32[128,1], index: 1, kind: input, shape index: {}]
  %s2 = inlined_call_operand.vmem [shape: f32[32,32], index: 2, kind: input, shape index: {}]
  %s3 = inlined_call_operand.vmem [shape: f32[4,8], index: 3, kind: input, shape index: {}]
  %s4 = inlined_call_operand.vmem [shape: f32[32,1], index: 4, kind: input, shape index: {}]
  %s5 = inlined_call_operand.<no memory space> [shape: f32[1,1], index: 5, kind: input, shape index: {}]
  %s6 = inlined_call_operand.vmem [shape: f32[104,64], index: 6, kind: input, shape index: {}]
  %s7 = inlined_call_operand.vmem [shape: f32[1,64], index: 7, kind: input, shape index: {}]
  %s8 = inlined_call_operand.vmem [shape: f32[64,1], index: 8, kind: input, shape index: {}]
  %s9 = inlined_call_operand.<no memory space> [shape: f32[1,1], index: 9, kind: input, shape index: {}]
  %s10 = inlined_call_operand.vmem [shape: f32[128,104], index: 10, kind: output, shape index: {0}]
  %s11 = inlined_call_operand.hbm [shape: f32[1,128], index: 11, kind: output, shape index: {1}]
  %12 = xla_tuple %s10, %s11
  %s13 = sld [smem:[#allocation0]]
  $region58: #{tpu_custom_call.1} parent=0
    _
  %s15 = ssub.s32 1, %s13
  %s16 = scalar_select 0, %s15, %s13
  %v17 = vstv %s5
  %18 = vst [vmem:[#allocation2] sm:$0x1] %v17
  %v19 = vstv %s9
  %20 = vst [vmem:[#allocation3] sm:$0x1] %v19
  $region1: #{tpu_custom_call.1} parent=0
    #allocation4 [shape = 'u8[512]{0}', space=vmem, size = 0x400, scoped, tag = 'output window, operand 1, single buffered']
    #allocation5 [shape = 's32[1]{0}', space=sflag, size = 0x4, scoped, tag = 'scoped memory for tpu_custom_call.1']
    %21 = vsyncpa [#allocation5], 0
    // Predicated region
    $region2: #{tpu_custom_call.1} parent=1 // pred_check
      _
    $region3: #{tpu_custom_call.1} parent=1 // pred_check_branch
      %23 = sbr.rel (0) target = $region5
    $region4: #{tpu_custom_call.1} parent=1 // pred_region
      _
    $region5: #{tpu_custom_call.1} parent=1 // pred_fallthru
      _
    // Predicated region
    $region6: #{tpu_custom_call.1} parent=1 // pred_check
      _
    $region7: #{tpu_custom_call.1} parent=1 // pred_check_branch
      %25 = sbr.rel (0) target = $region9
    $region8: #{tpu_custom_call.1} parent=1 // pred_region
      _
    $region9: #{tpu_custom_call.1} parent=1 // pred_fallthru
      _
    // Predicated region
    $region10: #{tpu_custom_call.1} parent=1 // pred_check
      _
    $region11: #{tpu_custom_call.1} parent=1 // pred_check_branch
      %27 = sbr.rel (0) target = $region13
    $region12: #{tpu_custom_call.1} parent=1 // pred_region
      _
    $region13: #{tpu_custom_call.1} parent=1 // pred_fallthru
      _
    // Predicated region
    $region14: #{tpu_custom_call.1} parent=1 // pred_check
      _
    $region15: #{tpu_custom_call.1} parent=1 // pred_check_branch
      %29 = sbr.rel (0) target = $region17
    $region16: #{tpu_custom_call.1} parent=1 // pred_region
      _
    $region17: #{tpu_custom_call.1} parent=1 // pred_fallthru
      _
    // Predicated region
    $region18: #{tpu_custom_call.1} parent=1 // pred_check
      _
    $region19: #{tpu_custom_call.1} parent=1 // pred_check_branch
      %31 = sbr.rel (0) target = $region21
    $region20: #{tpu_custom_call.1} parent=1 // pred_region
      _
    $region21: #{tpu_custom_call.1} parent=1 // pred_fallthru
      _
    // Predicated region
    $region22: #{tpu_custom_call.1} parent=1 // pred_check
      _
    $region23: #{tpu_custom_call.1} parent=1 // pred_check_branch
      %33 = sbr.rel (0) target = $region25
    $region24: #{tpu_custom_call.1} parent=1 // pred_region
      _
    $region25: #{tpu_custom_call.1} parent=1 // pred_fallthru
      _
    // Predicated region
    $region26: #{tpu_custom_call.1} parent=1 // pred_check
      _
    $region27: #{tpu_custom_call.1} parent=1 // pred_check_branch
      %35 = sbr.rel (0) target = $region29
    $region28: #{tpu_custom_call.1} parent=1 // pred_region
      _
    $region29: #{tpu_custom_call.1} parent=1 // pred_fallthru
      _
    // Predicated region
    $region30: #{tpu_custom_call.1} parent=1 // pred_check
      _
    $region31: #{tpu_custom_call.1} parent=1 // pred_check_branch
      %37 = sbr.rel (0) target = $region33
    $region32: #{tpu_custom_call.1} parent=1 // pred_region
      _
    $region33: #{tpu_custom_call.1} parent=1 // pred_fallthru
      _
    // Predicated region
    $region34: #{tpu_custom_call.1} parent=1 // pred_check
      _
    $region35: #{tpu_custom_call.1} parent=1 // pred_check_branch
      %39 = sbr.rel (0) target = $region37
    $region36: #{tpu_custom_call.1} parent=1 // pred_region
      _
    $region37: #{tpu_custom_call.1} parent=1 // pred_fallthru
      _
    // Predicated region
    $region38: #{tpu_custom_call.1} parent=1 // pred_check
      _
    $region39: #{tpu_custom_call.1} parent=1 // pred_check_branch
      %41 = sbr.rel (0) target = $region41
    $region40: #{tpu_custom_call.1} parent=1 // pred_region
      _
    $region41: #{tpu_custom_call.1} parent=1 // pred_fallthru
      _
    %v43 = vld [vmem:[%s2] sm:$0xff]
    %v44 = vld [vmem:[%s2 + $0x8] sm:$0xff]
    %v45 = vld [vmem:[%s2 + $0x10] sm:$0xff]
    %v46 = vld [vmem:[%s2 + $0x18] sm:$0xff]
    %v47 = vld [vmem:[%s0] sm:$0xff]
    %v48 = vld [vmem:[%s0 + $0x8] sm:$0xff]
    %v49 = vld [vmem:[%s0 + $0x10] sm:$0xff]
    %v50 = vld [vmem:[%s0 + $0x18] sm:$0xff]
    %v51 = vld [vmem:[%s0 + $0x20] sm:$0xff]
    %v52 = vld [vmem:[%s0 + $0x28] sm:$0xff]
    %v53 = vld [vmem:[%s0 + $0x30] sm:$0xff]
    %v54 = vld [vmem:[%s0 + $0x38] sm:$0xff]
    %v55 = vld [vmem:[%s0 + $0x40] sm:$0xff]
    %v56 = vld [vmem:[%s0 + $0x48] sm:$0xff]
    %v57 = vld [vmem:[%s0 + $0x50] sm:$0xff]
    %v58 = vld [vmem:[%s0 + $0x58] sm:$0xff]
    %v59 = vld [vmem:[%s0 + $0x60] sm:$0xff]
    %v60 = vld [vmem:[%s0 + $0x68] sm:$0xff]
    %v61 = vld [vmem:[%s0 + $0x70] sm:$0xff]
    %v62 = vld [vmem:[%s0 + $0x78] sm:$0xff]
    %v63 = vld [vmem:[%s1] sm:$0xff]
    %v64 = vld [vmem:[%s1 + $0x8] sm:$0xff]
    %v65 = vld [vmem:[%s1 + $0x10] sm:$0xff]
    %v66 = vld [vmem:[%s1 + $0x18] sm:$0xff]
    %v67 = vld [vmem:[%s1 + $0x20] sm:$0xff]
    %v68 = vld [vmem:[%s1 + $0x28] sm:$0xff]
    %v69 = vld [vmem:[%s1 + $0x30] sm:$0xff]
    %v70 = vld [vmem:[%s1 + $0x38] sm:$0xff]
    %v71 = vld [vmem:[%s1 + $0x40] sm:$0xff]
    %v72 = vld [vmem:[%s1 + $0x48] sm:$0xff]
    %v73 = vld [vmem:[%s1 + $0x50] sm:$0xff]
    %v74 = vld [vmem:[%s1 + $0x58] sm:$0xff]
    %v75 = vld [vmem:[%s1 + $0x60] sm:$0xff]
    %v76 = vld [vmem:[%s1 + $0x68] sm:$0xff]
    %v77 = vld [vmem:[%s1 + $0x70] sm:$0xff]
    %v78 = vld [vmem:[%s1 + $0x78] sm:$0xff]
    %v79 = vlaneseq
    %v80 = vand.u32 %v79, 127
    %81 = vset.pattern.permute.xlu0 0
    %82 = vperm.xlu0 %81, %v47
    %v83 = vpop.permute.xlu0 %82
    %84 = vset.pattern.permute.xlu0 0
    %85 = vperm.xlu0 %84, %v48
    %v86 = vpop.permute.xlu0 %85
    %87 = vset.pattern.permute.xlu0 0
    %88 = vperm.xlu0 %87, %v49
    %v89 = vpop.permute.xlu0 %88
    %90 = vset.pattern.permute.xlu0 0
    %91 = vperm.xlu0 %90, %v50
    %v92 = vpop.permute.xlu0 %91
    %93 = vset.pattern.permute.xlu0 0
    %94 = vperm.xlu0 %93, %v51
    %v95 = vpop.permute.xlu0 %94
    %96 = vset.pattern.permute.xlu0 0
    %97 = vperm.xlu0 %96, %v52
    %v98 = vpop.permute.xlu0 %97
    %99 = vset.pattern.permute.xlu0 0
    %100 = vperm.xlu0 %99, %v53
    %v101 = vpop.permute.xlu0 %100
    %102 = vset.pattern.permute.xlu0 0
    %103 = vperm.xlu0 %102, %v54
    %v104 = vpop.permute.xlu0 %103
    %105 = vset.pattern.permute.xlu0 0
    %106 = vperm.xlu0 %105, %v55
    %v107 = vpop.permute.xlu0 %106
    %108 = vset.pattern.permute.xlu0 0
    %109 = vperm.xlu0 %108, %v56
    %v110 = vpop.permute.xlu0 %109
    %111 = vset.pattern.permute.xlu0 0
    %112 = vperm.xlu0 %111, %v57
    %v113 = vpop.permute.xlu0 %112
    %114 = vset.pattern.permute.xlu0 0
    %115 = vperm.xlu0 %114, %v58
    %v116 = vpop.permute.xlu0 %115
    %117 = vset.pattern.permute.xlu0 0
    %118 = vperm.xlu0 %117, %v59
    %v119 = vpop.permute.xlu0 %118
    %120 = vset.pattern.permute.xlu0 0
    %121 = vperm.xlu0 %120, %v60
    %v122 = vpop.permute.xlu0 %121
    %123 = vset.pattern.permute.xlu0 0
    %124 = vperm.xlu0 %123, %v61
    %v125 = vpop.permute.xlu0 %124
    %126 = vset.pattern.permute.xlu0 0
    %127 = vperm.xlu0 %126, %v62
    %v128 = vpop.permute.xlu0 %127
    %vm129 = vcmp.eq.s32.totalorder %v80, %v83
    %vm130 = vcmp.eq.s32.totalorder %v80, %v86
    %vm131 = vcmp.eq.s32.totalorder %v80, %v89
    %vm132 = vcmp.eq.s32.totalorder %v80, %v92
    %vm133 = vcmp.eq.s32.totalorder %v80, %v95
    %vm134 = vcmp.eq.s32.totalorder %v80, %v98
    %vm135 = vcmp.eq.s32.totalorder %v80, %v101
    %vm136 = vcmp.eq.s32.totalorder %v80, %v104
    %vm137 = vcmp.eq.s32.totalorder %v80, %v107
    %vm138 = vcmp.eq.s32.totalorder %v80, %v110
    %vm139 = vcmp.eq.s32.totalorder %v80, %v113
    %vm140 = vcmp.eq.s32.totalorder %v80, %v116
    %vm141 = vcmp.eq.s32.totalorder %v80, %v119
    %vm142 = vcmp.eq.s32.totalorder %v80, %v122
    %vm143 = vcmp.eq.s32.totalorder %v80, %v125
    %vm144 = vcmp.eq.s32.totalorder %v80, %v128
    %v145 = vsel %vm129, 1, 0
    %v146 = vsel %vm130, 1, 0
    %v147 = vsel %vm131, 1, 0
    %v148 = vsel %vm132, 1, 0
    %v149 = vsel %vm133, 1, 0
    %v150 = vsel %vm134, 1, 0
    %v151 = vsel %vm135, 1, 0
    %v152 = vsel %vm136, 1, 0
    %v153 = vsel %vm137, 1, 0
    %v154 = vsel %vm138, 1, 0
    %v155 = vsel %vm139, 1, 0
    %v156 = vsel %vm140, 1, 0
    %v157 = vsel %vm141, 1, 0
    %v158 = vsel %vm142, 1, 0
    %v159 = vsel %vm143, 1, 0
    %v160 = vsel %vm144, 1, 0
    %v161 = vcvt.s32.f32 %v145
    %v162 = vcvt.s32.f32 %v146
    %v163 = vcvt.s32.f32 %v147
    %v164 = vcvt.s32.f32 %v148
    %v165 = vcvt.s32.f32 %v149
    %v166 = vcvt.s32.f32 %v150
    %v167 = vcvt.s32.f32 %v151
    %v168 = vcvt.s32.f32 %v152
    %v169 = vcvt.s32.f32 %v153
    %v170 = vcvt.s32.f32 %v154
    %v171 = vcvt.s32.f32 %v155
    %v172 = vcvt.s32.f32 %v156
    %v173 = vcvt.s32.f32 %v157
    %v174 = vcvt.s32.f32 %v158
    %v175 = vcvt.s32.f32 %v159
    %v176 = vcvt.s32.f32 %v160
    %177 = vset.pattern.permute.xlu0 0
    %178 = vperm.xlu0 %177, %v63
    %v179 = vpop.permute.xlu0 %178
    %180 = vset.pattern.permute.xlu0 0
    %181 = vperm.xlu0 %180, %v64
    %v182 = vpop.permute.xlu0 %181
    %183 = vset.pattern.permute.xlu0 0
    %184 = vperm.xlu0 %183, %v65
    %v185 = vpop.permute.xlu0 %184
    %186 = vset.pattern.permute.xlu0 0
    %187 = vperm.xlu0 %186, %v66
    %v188 = vpop.permute.xlu0 %187
    %189 = vset.pattern.permute.xlu0 0
    %190 = vperm.xlu0 %189, %v67
    %v191 = vpop.permute.xlu0 %190
    %192 = vset.pattern.permute.xlu0 0
    %193 = vperm.xlu0 %192, %v68
    %v194 = vpop.permute.xlu0 %193
    %195 = vset.pattern.permute.xlu0 0
    %196 = vperm.xlu0 %195, %v69
    %v197 = vpop.permute.xlu0 %196
    %198 = vset.pattern.permute.xlu0 0
    %199 = vperm.xlu0 %198, %v70
    %v200 = vpop.permute.xlu0 %199
    %201 = vset.pattern.permute.xlu0 0
    %202 = vperm.xlu0 %201, %v71
    %v203 = vpop.permute.xlu0 %202
    %204 = vset.pattern.permute.xlu0 0
    %205 = vperm.xlu0 %204, %v72
    %v206 = vpop.permute.xlu0 %205
    %207 = vset.pattern.permute.xlu0 0
    %208 = vperm.xlu0 %207, %v73
    %v209 = vpop.permute.xlu0 %208
    %210 = vset.pattern.permute.xlu0 0
    %211 = vperm.xlu0 %210, %v74
    %v212 = vpop.permute.xlu0 %211
    %213 = vset.pattern.permute.xlu0 0
    %214 = vperm.xlu0 %213, %v75
    %v215 = vpop.permute.xlu0 %214
    %216 = vset.pattern.permute.xlu0 0
    %217 = vperm.xlu0 %216, %v76
    %v218 = vpop.permute.xlu0 %217
    %219 = vset.pattern.permute.xlu0 0
    %220 = vperm.xlu0 %219, %v77
    %v221 = vpop.permute.xlu0 %220
    %222 = vset.pattern.permute.xlu0 0
    %223 = vperm.xlu0 %222, %v78
    %v224 = vpop.permute.xlu0 %223
    %vm225 = vcmp.eq.s32.totalorder %v80, %v179
    %vm226 = vcmp.eq.s32.totalorder %v80, %v182
    %vm227 = vcmp.eq.s32.totalorder %v80, %v185
    %vm228 = vcmp.eq.s32.totalorder %v80, %v188
    %vm229 = vcmp.eq.s32.totalorder %v80, %v191
    %vm230 = vcmp.eq.s32.totalorder %v80, %v194
    %vm231 = vcmp.eq.s32.totalorder %v80, %v197
    %vm232 = vcmp.eq.s32.totalorder %v80, %v200
    %vm233 = vcmp.eq.s32.totalorder %v80, %v203
    %vm234 = vcmp.eq.s32.totalorder %v80, %v206
    %vm235 = vcmp.eq.s32.totalorder %v80, %v209
    %vm236 = vcmp.eq.s32.totalorder %v80, %v212
    %vm237 = vcmp.eq.s32.totalorder %v80, %v215
    %vm238 = vcmp.eq.s32.totalorder %v80, %v218
    %vm239 = vcmp.eq.s32.totalorder %v80, %v221
    %vm240 = vcmp.eq.s32.totalorder %v80, %v224
    %v241 = vsel %vm225, 1, 0
    %v242 = vsel %vm226, 1, 0
    %v243 = vsel %vm227, 1, 0
    %v244 = vsel %vm228, 1, 0
    %v245 = vsel %vm229, 1, 0
    %v246 = vsel %vm230, 1, 0
    %v247 = vsel %vm231, 1, 0
    %v248 = vsel %vm232, 1, 0
    %v249 = vsel %vm233, 1, 0
    %v250 = vsel %vm234, 1, 0
    %v251 = vsel %vm235, 1, 0
    %v252 = vsel %vm236, 1, 0
    %v253 = vsel %vm237, 1, 0
    %v254 = vsel %vm238, 1, 0
    %v255 = vsel %vm239, 1, 0
    %v256 = vsel %vm240, 1, 0
    %v257 = vcvt.s32.f32 %v241
    %v258 = vcvt.s32.f32 %v242
    %v259 = vcvt.s32.f32 %v243
    %v260 = vcvt.s32.f32 %v244
    %v261 = vcvt.s32.f32 %v245
    %v262 = vcvt.s32.f32 %v246
    %v263 = vcvt.s32.f32 %v247
    %v264 = vcvt.s32.f32 %v248
    %v265 = vcvt.s32.f32 %v249
    %v266 = vcvt.s32.f32 %v250
    %v267 = vcvt.s32.f32 %v251
    %v268 = vcvt.s32.f32 %v252
    %v269 = vcvt.s32.f32 %v253
    %v270 = vcvt.s32.f32 %v254
    %v271 = vcvt.s32.f32 %v255
    %v272 = vcvt.s32.f32 %v256
    %vm273 = vcmask 261120
    %v275 = vsel %vm273, %v161, 0
    %v278 = vsel %vm273, %v162, 0
    %v281 = vsel %vm273, %v163, 0
    %v284 = vsel %vm273, %v164, 0
    %v287 = vsel %vm273, %v165, 0
    %v290 = vsel %vm273, %v166, 0
    %v293 = vsel %vm273, %v167, 0
    %v296 = vsel %vm273, %v168, 0
    %v299 = vsel %vm273, %v169, 0
    %v302 = vsel %vm273, %v170, 0
    %v305 = vsel %vm273, %v171, 0
    %v308 = vsel %vm273, %v172, 0
    %v311 = vsel %vm273, %v173, 0
    %v314 = vsel %vm273, %v174, 0
    %v317 = vsel %vm273, %v175, 0
    %v320 = vsel %vm273, %v176, 0
    %322 = vmatprep.subr.mxu0 0.0
    %323 = vmatpush1.msra.mxu0 0.0
    %324 = vmatprep.subr.mxu0 0.0
    %325 = vmatpush1.msra.mxu0 0.0
    %326 = vmatprep.subr.mxu0 0.0
    %327 = vmatpush1.msra.mxu0 0.0
    %328 = vmatprep.subr.mxu0 0.0
    %329 = vmatpush1.msra.mxu0 0.0
    %330 = vmatprep.subr.mxu0 0.0
    %331 = vmatpush1.msra.mxu0 0.0
    %332 = vmatprep.subr.mxu0 0.0
    %333 = vmatpush1.msra.mxu0 0.0
    %334 = vmatprep.subr.mxu0 0.0
    %335 = vmatpush1.msra.mxu0 0.0
    %336 = vmatprep.subr.mxu0 0.0
    %337 = vmatpush1.msra.mxu0 0.0
    %338 = vmatprep.subr.mxu0 0.0
    %339 = vmatpush1.msra.mxu0 0.0
    %340 = vmatprep.subr.mxu0 0.0
    %341 = vmatpush1.msra.mxu0 0.0
    %342 = vmatprep.subr.mxu0 0.0
    %343 = vmatpush1.msra.mxu0 0.0
    %344 = vmatprep.subr.mxu0 0.0
    %345 = vmatpush1.msra.mxu0 0.0
    %346 = vmatprep.subr.mxu0 0.0
    %347 = vmatpush1.msra.mxu0 %v46
    %348 = vmatprep.subr.mxu0 0.0
    %349 = vmatpush1.msra.mxu0 %v45
    %350 = vmatprep.subr.mxu0 0.0
    %351 = vmatpush1.msra.mxu0 %v44
    %352 = vmatprep.subr.mxu0 0.0
    %353 = vmatpush1.msra.mxu0 %v43
    %354 = vmatprep.subr.mxu0 0.0
    %355 = vmatpush2.msra.mxu0 0.0
    %356 = vmatprep.subr.mxu0 0.0
    %357 = vmatpush2.msra.mxu0 0.0
    %358 = vmatprep.subr.mxu0 0.0
    %359 = vmatpush2.msra.mxu0 0.0
    %360 = vmatprep.subr.mxu0 0.0
    %361 = vmatpush2.msra.mxu0 0.0
    %362 = vmatprep.subr.mxu0 0.0
    %363 = vmatpush2.msra.mxu0 0.0
    %364 = vmatprep.subr.mxu0 0.0
    %365 = vmatpush2.msra.mxu0 0.0
    %366 = vmatprep.subr.mxu0 0.0
    %367 = vmatpush2.msra.mxu0 0.0
    %368 = vmatprep.subr.mxu0 0.0
    %369 = vmatpush2.msra.mxu0 0.0
    %370 = vmatprep.subr.mxu0 0.0
    %371 = vmatpush2.msra.mxu0 0.0
    %372 = vmatprep.subr.mxu0 0.0
    %373 = vmatpush2.msra.mxu0 0.0
    %374 = vmatprep.subr.mxu0 0.0
    %375 = vmatpush2.msra.mxu0 0.0
    %376 = vmatprep.subr.mxu0 0.0
    %377 = vmatpush2.msra.mxu0 0.0
    %378 = vmatprep.subr.mxu0 0.0
    %379 = vmatpush2.msra.mxu0 0.0
    %380 = vmatprep.subr.mxu0 0.0
    %381 = vmatpush2.msra.mxu0 0.0
    %382 = vmatprep.subr.mxu0 0.0
    %383 = vmatpush2.msra.mxu0 0.0
    %384 = vmatprep.subr.mxu0 0.0
    %385 = vmatpush2.msra.mxu0 0.0
    %386 = vmatprep.mubr.f32.mxu0 0.0
    %387 = vmatmul.mubr.f32.gmra.mxu0 %v275
    %v388 = vpop.f32.mrf.mxu0
    %v389 = vadd.f32 0.0, %v388
    %v390 = vpop.f32.mrf.mxu0
    %391 = vmatprep.mubr.f32.mxu0 0.0
    %392 = vmatmul.mubr.f32.gmra.mxu0 %v278
    %v393 = vpop.f32.mrf.mxu0
    %v394 = vadd.f32 0.0, %v393
    %v395 = vpop.f32.mrf.mxu0
    %396 = vmatprep.mubr.f32.mxu0 0.0
    %397 = vmatmul.mubr.f32.gmra.mxu0 %v281
    %v398 = vpop.f32.mrf.mxu0
    %v399 = vadd.f32 0.0, %v398
    %v400 = vpop.f32.mrf.mxu0
    %401 = vmatprep.mubr.f32.mxu0 0.0
    %402 = vmatmul.mubr.f32.gmra.mxu0 %v284
    %v403 = vpop.f32.mrf.mxu0
    %v404 = vadd.f32 0.0, %v403
    %v405 = vpop.f32.mrf.mxu0
    %406 = vmatprep.mubr.f32.mxu0 0.0
    %407 = vmatmul.mubr.f32.gmra.mxu0 %v287
    %v408 = vpop.f32.mrf.mxu0
    %v409 = vadd.f32 0.0, %v408
    %v410 = vpop.f32.mrf.mxu0
    %411 = vmatprep.mubr.f32.mxu0 0.0
    %412 = vmatmul.mubr.f32.gmra.mxu0 %v290
    %v413 = vpop.f32.mrf.mxu0
    %v414 = vadd.f32 0.0, %v413
    %v415 = vpop.f32.mrf.mxu0
    %416 = vmatprep.mubr.f32.mxu0 0.0
    %417 = vmatmul.mubr.f32.gmra.mxu0 %v293
    %v418 = vpop.f32.mrf.mxu0
    %v419 = vadd.f32 0.0, %v418
    %v420 = vpop.f32.mrf.mxu0
    %421 = vmatprep.mubr.f32.mxu0 0.0
    %422 = vmatmul.mubr.f32.gmra.mxu0 %v296
    %v423 = vpop.f32.mrf.mxu0
    %v424 = vadd.f32 0.0, %v423
    %v425 = vpop.f32.mrf.mxu0
    %426 = vmatprep.mubr.f32.mxu0 0.0
    %427 = vmatmul.mubr.f32.gmra.mxu0 %v299
    %v428 = vpop.f32.mrf.mxu0
    %v429 = vadd.f32 0.0, %v428
    %v430 = vpop.f32.mrf.mxu0
    %431 = vmatprep.mubr.f32.mxu0 0.0
    %432 = vmatmul.mubr.f32.gmra.mxu0 %v302
    %v433 = vpop.f32.mrf.mxu0
    %v434 = vadd.f32 0.0, %v433
    %v435 = vpop.f32.mrf.mxu0
    %436 = vmatprep.mubr.f32.mxu0 0.0
    %437 = vmatmul.mubr.f32.gmra.mxu0 %v305
    %v438 = vpop.f32.mrf.mxu0
    %v439 = vadd.f32 0.0, %v438
    %v440 = vpop.f32.mrf.mxu0
    %441 = vmatprep.mubr.f32.mxu0 0.0
    %442 = vmatmul.mubr.f32.gmra.mxu0 %v308
    %v443 = vpop.f32.mrf.mxu0
    %v444 = vadd.f32 0.0, %v443
    %v445 = vpop.f32.mrf.mxu0
    %446 = vmatprep.mubr.f32.mxu0 0.0
    %447 = vmatmul.mubr.f32.gmra.mxu0 %v311
    %v448 = vpop.f32.mrf.mxu0
    %v449 = vadd.f32 0.0, %v448
    %v450 = vpop.f32.mrf.mxu0
    %451 = vmatprep.mubr.f32.mxu0 0.0
    %452 = vmatmul.mubr.f32.gmra.mxu0 %v314
    %v453 = vpop.f32.mrf.mxu0
    %v454 = vadd.f32 0.0, %v453
    %v455 = vpop.f32.mrf.mxu0
    %456 = vmatprep.mubr.f32.mxu0 0.0
    %457 = vmatmul.mubr.f32.gmra.mxu0 %v317
    %v458 = vpop.f32.mrf.mxu0
    %v459 = vadd.f32 0.0, %v458
    %v460 = vpop.f32.mrf.mxu0
    %461 = vmatprep.mubr.f32.mxu0 0.0
    %462 = vmatmul.mubr.f32.gmra.mxu0 %v320
    %v463 = vpop.f32.mrf.mxu0
    %v464 = vadd.f32 0.0, %v463
    %v465 = vpop.f32.mrf.mxu0
    %466 = vdwg.mxu0
    %v468 = vsel %vm273, %v257, 0
    %v471 = vsel %vm273, %v258, 0
    %v474 = vsel %vm273, %v259, 0
    %v477 = vsel %vm273, %v260, 0
    %v480 = vsel %vm273, %v261, 0
    %v483 = vsel %vm273, %v262, 0
    %v486 = vsel %vm273, %v263, 0
    %v489 = vsel %vm273, %v264, 0
    %v492 = vsel %vm273, %v265, 0
    %v495 = vsel %vm273, %v266, 0
    %v498 = vsel %vm273, %v267, 0
    %v501 = vsel %vm273, %v268, 0
    %v504 = vsel %vm273, %v269, 0
    %v507 = vsel %vm273, %v270, 0
    %v510 = vsel %vm273, %v271, 0
    %v513 = vsel %vm273, %v272, 0
    %515 = vmatprep.subr.mxu0 0.0
    %516 = vmatpush1.msra.mxu0 0.0
    %517 = vmatprep.subr.mxu0 0.0
    %518 = vmatpush1.msra.mxu0 0.0
    %519 = vmatprep.subr.mxu0 0.0
    %520 = vmatpush1.msra.mxu0 0.0
    %521 = vmatprep.subr.mxu0 0.0
    %522 = vmatpush1.msra.mxu0 0.0
    %523 = vmatprep.subr.mxu0 0.0
    %524 = vmatpush1.msra.mxu0 0.0
    %525 = vmatprep.subr.mxu0 0.0
    %526 = vmatpush1.msra.mxu0 0.0
    %527 = vmatprep.subr.mxu0 0.0
    %528 = vmatpush1.msra.mxu0 0.0
    %529 = vmatprep.subr.mxu0 0.0
    %530 = vmatpush1.msra.mxu0 0.0
    %531 = vmatprep.subr.mxu0 0.0
    %532 = vmatpush1.msra.mxu0 0.0
    %533 = vmatprep.subr.mxu0 0.0
    %534 = vmatpush1.msra.mxu0 0.0
    %535 = vmatprep.subr.mxu0 0.0
    %536 = vmatpush1.msra.mxu0 0.0
    %537 = vmatprep.subr.mxu0 0.0
    %538 = vmatpush1.msra.mxu0 0.0
    %539 = vmatprep.subr.mxu0 0.0
    %540 = vmatpush1.msra.mxu0 %v46
    %541 = vmatprep.subr.mxu0 0.0
    %542 = vmatpush1.msra.mxu0 %v45
    %543 = vmatprep.subr.mxu0 0.0
    %544 = vmatpush1.msra.mxu0 %v44
    %545 = vmatprep.subr.mxu0 0.0
    %546 = vmatpush1.msra.mxu0 %v43
    %547 = vmatprep.subr.mxu0 0.0
    %548 = vmatpush2.msra.mxu0 0.0
    %549 = vmatprep.subr.mxu0 0.0
    %550 = vmatpush2.msra.mxu0 0.0
    %551 = vmatprep.subr.mxu0 0.0
    %552 = vmatpush2.msra.mxu0 0.0
    %553 = vmatprep.subr.mxu0 0.0
    %554 = vmatpush2.msra.mxu0 0.0
    %555 = vmatprep.subr.mxu0 0.0
    %556 = vmatpush2.msra.mxu0 0.0
    %557 = vmatprep.subr.mxu0 0.0
    %558 = vmatpush2.msra.mxu0 0.0
    %559 = vmatprep.subr.mxu0 0.0
    %560 = vmatpush2.msra.mxu0 0.0
    %561 = vmatprep.subr.mxu0 0.0
    %562 = vmatpush2.msra.mxu0 0.0
    %563 = vmatprep.subr.mxu0 0.0
    %564 = vmatpush2.msra.mxu0 0.0
    %565 = vmatprep.subr.mxu0 0.0
    %566 = vmatpush2.msra.mxu0 0.0
    %567 = vmatprep.subr.mxu0 0.0
    %568 = vmatpush2.msra.mxu0 0.0
    %569 = vmatprep.subr.mxu0 0.0
    %570 = vmatpush2.msra.mxu0 0.0
    %571 = vmatprep.subr.mxu0 0.0
    %572 = vmatpush2.msra.mxu0 0.0
    %573 = vmatprep.subr.mxu0 0.0
    %574 = vmatpush2.msra.mxu0 0.0
    %575 = vmatprep.subr.mxu0 0.0
    %576 = vmatpush2.msra.mxu0 0.0
    %577 = vmatprep.subr.mxu0 0.0
    %578 = vmatpush2.msra.mxu0 0.0
    %579 = vmatprep.mubr.f32.mxu0 0.0
    %580 = vmatmul.mubr.f32.gmra.mxu0 %v468
    %v581 = vpop.f32.mrf.mxu0
    %v582 = vadd.f32 0.0, %v581
    %v583 = vpop.f32.mrf.mxu0
    %584 = vmatprep.mubr.f32.mxu0 0.0
    %585 = vmatmul.mubr.f32.gmra.mxu0 %v471
    %v586 = vpop.f32.mrf.mxu0
    %v587 = vadd.f32 0.0, %v586
    %v588 = vpop.f32.mrf.mxu0
    %589 = vmatprep.mubr.f32.mxu0 0.0
    %590 = vmatmul.mubr.f32.gmra.mxu0 %v474
    %v591 = vpop.f32.mrf.mxu0
    %v592 = vadd.f32 0.0, %v591
    %v593 = vpop.f32.mrf.mxu0
    %594 = vmatprep.mubr.f32.mxu0 0.0
    %595 = vmatmul.mubr.f32.gmra.mxu0 %v477
    %v596 = vpop.f32.mrf.mxu0
    %v597 = vadd.f32 0.0, %v596
    %v598 = vpop.f32.mrf.mxu0
    %599 = vmatprep.mubr.f32.mxu0 0.0
    %600 = vmatmul.mubr.f32.gmra.mxu0 %v480
    %v601 = vpop.f32.mrf.mxu0
    %v602 = vadd.f32 0.0, %v601
    %v603 = vpop.f32.mrf.mxu0
    %604 = vmatprep.mubr.f32.mxu0 0.0
    %605 = vmatmul.mubr.f32.gmra.mxu0 %v483
    %v606 = vpop.f32.mrf.mxu0
    %v607 = vadd.f32 0.0, %v606
    %v608 = vpop.f32.mrf.mxu0
    %609 = vmatprep.mubr.f32.mxu0 0.0
    %610 = vmatmul.mubr.f32.gmra.mxu0 %v486
    %v611 = vpop.f32.mrf.mxu0
    %v612 = vadd.f32 0.0, %v611
    %v613 = vpop.f32.mrf.mxu0
    %614 = vmatprep.mubr.f32.mxu0 0.0
    %615 = vmatmul.mubr.f32.gmra.mxu0 %v489
    %v616 = vpop.f32.mrf.mxu0
    %v617 = vadd.f32 0.0, %v616
    %v618 = vpop.f32.mrf.mxu0
    %619 = vmatprep.mubr.f32.mxu0 0.0
    %620 = vmatmul.mubr.f32.gmra.mxu0 %v492
    %v621 = vpop.f32.mrf.mxu0
    %v622 = vadd.f32 0.0, %v621
    %v623 = vpop.f32.mrf.mxu0
    %624 = vmatprep.mubr.f32.mxu0 0.0
    %625 = vmatmul.mubr.f32.gmra.mxu0 %v495
    %v626 = vpop.f32.mrf.mxu0
    %v627 = vadd.f32 0.0, %v626
    %v628 = vpop.f32.mrf.mxu0
    %629 = vmatprep.mubr.f32.mxu0 0.0
    %630 = vmatmul.mubr.f32.gmra.mxu0 %v498
    %v631 = vpop.f32.mrf.mxu0
    %v632 = vadd.f32 0.0, %v631
    %v633 = vpop.f32.mrf.mxu0
    %634 = vmatprep.mubr.f32.mxu0 0.0
    %635 = vmatmul.mubr.f32.gmra.mxu0 %v501
    %v636 = vpop.f32.mrf.mxu0
    %v637 = vadd.f32 0.0, %v636
    %v638 = vpop.f32.mrf.mxu0
    %639 = vmatprep.mubr.f32.mxu0 0.0
    %640 = vmatmul.mubr.f32.gmra.mxu0 %v504
    %v641 = vpop.f32.mrf.mxu0
    %v642 = vadd.f32 0.0, %v641
    %v643 = vpop.f32.mrf.mxu0
    %644 = vmatprep.mubr.f32.mxu0 0.0
    %645 = vmatmul.mubr.f32.gmra.mxu0 %v507
    %v646 = vpop.f32.mrf.mxu0
    %v647 = vadd.f32 0.0, %v646
    %v648 = vpop.f32.mrf.mxu0
    %649 = vmatprep.mubr.f32.mxu0 0.0
    %650 = vmatmul.mubr.f32.gmra.mxu0 %v510
    %v651 = vpop.f32.mrf.mxu0
    %v652 = vadd.f32 0.0, %v651
    %v653 = vpop.f32.mrf.mxu0
    %654 = vmatprep.mubr.f32.mxu0 0.0
    %655 = vmatmul.mubr.f32.gmra.mxu0 %v513
    %v656 = vpop.f32.mrf.mxu0
    %v657 = vadd.f32 0.0, %v656
    %v658 = vpop.f32.mrf.mxu0
    %659 = vdwg.mxu0
    %v660 = vld [vmem:[%s3] sm:$0xf]
    %v661 = vsub.s32 %v63, %v47
    %v662 = vsub.s32 %v64, %v48
    %v663 = vsub.s32 %v65, %v49
    %v664 = vsub.s32 %v66, %v50
    %v665 = vsub.s32 %v67, %v51
    %v666 = vsub.s32 %v68, %v52
    %v667 = vsub.s32 %v69, %v53
    %v668 = vsub.s32 %v70, %v54
    %v669 = vsub.s32 %v71, %v55
    %v670 = vsub.s32 %v72, %v56
    %v671 = vsub.s32 %v73, %v57
    %v672 = vsub.s32 %v74, %v58
    %v673 = vsub.s32 %v75, %v59
    %v674 = vsub.s32 %v76, %v60
    %v675 = vsub.s32 %v77, %v61
    %v676 = vsub.s32 %v78, %v62
    %677 = vset.pattern.permute.xlu0 0
    %678 = vperm.xlu0 %677, %v661
    %v679 = vpop.permute.xlu0 %678
    %680 = vset.pattern.permute.xlu0 0
    %681 = vperm.xlu0 %680, %v662
    %v682 = vpop.permute.xlu0 %681
    %683 = vset.pattern.permute.xlu0 0
    %684 = vperm.xlu0 %683, %v663
    %v685 = vpop.permute.xlu0 %684
    %686 = vset.pattern.permute.xlu0 0
    %687 = vperm.xlu0 %686, %v664
    %v688 = vpop.permute.xlu0 %687
    %689 = vset.pattern.permute.xlu0 0
    %690 = vperm.xlu0 %689, %v665
    %v691 = vpop.permute.xlu0 %690
    %692 = vset.pattern.permute.xlu0 0
    %693 = vperm.xlu0 %692, %v666
    %v694 = vpop.permute.xlu0 %693
    %695 = vset.pattern.permute.xlu0 0
    %696 = vperm.xlu0 %695, %v667
    %v697 = vpop.permute.xlu0 %696
    %698 = vset.pattern.permute.xlu0 0
    %699 = vperm.xlu0 %698, %v668
    %v700 = vpop.permute.xlu0 %699
    %701 = vset.pattern.permute.xlu0 0
    %702 = vperm.xlu0 %701, %v669
    %v703 = vpop.permute.xlu0 %702
    %704 = vset.pattern.permute.xlu0 0
    %705 = vperm.xlu0 %704, %v670
    %v706 = vpop.permute.xlu0 %705
    %707 = vset.pattern.permute.xlu0 0
    %708 = vperm.xlu0 %707, %v671
    %v709 = vpop.permute.xlu0 %708
    %710 = vset.pattern.permute.xlu0 0
    %711 = vperm.xlu0 %710, %v672
    %v712 = vpop.permute.xlu0 %711
    %713 = vset.pattern.permute.xlu0 0
    %714 = vperm.xlu0 %713, %v673
    %v715 = vpop.permute.xlu0 %714
    %716 = vset.pattern.permute.xlu0 0
    %717 = vperm.xlu0 %716, %v674
    %v718 = vpop.permute.xlu0 %717
    %719 = vset.pattern.permute.xlu0 0
    %720 = vperm.xlu0 %719, %v675
    %v721 = vpop.permute.xlu0 %720
    %722 = vset.pattern.permute.xlu0 0
    %723 = vperm.xlu0 %722, %v676
    %v724 = vpop.permute.xlu0 %723
    %vm725 = vcmp.eq.s32.totalorder %v80, %v679
    %vm726 = vcmp.eq.s32.totalorder %v80, %v682
    %vm727 = vcmp.eq.s32.totalorder %v80, %v685
    %vm728 = vcmp.eq.s32.totalorder %v80, %v688
    %vm729 = vcmp.eq.s32.totalorder %v80, %v691
    %vm730 = vcmp.eq.s32.totalorder %v80, %v694
    %vm731 = vcmp.eq.s32.totalorder %v80, %v697
    %vm732 = vcmp.eq.s32.totalorder %v80, %v700
    %vm733 = vcmp.eq.s32.totalorder %v80, %v703
    %vm734 = vcmp.eq.s32.totalorder %v80, %v706
    %vm735 = vcmp.eq.s32.totalorder %v80, %v709
    %vm736 = vcmp.eq.s32.totalorder %v80, %v712
    %vm737 = vcmp.eq.s32.totalorder %v80, %v715
    %vm738 = vcmp.eq.s32.totalorder %v80, %v718
    %vm739 = vcmp.eq.s32.totalorder %v80, %v721
    %vm740 = vcmp.eq.s32.totalorder %v80, %v724
    %v741 = vsel %vm725, 1, 0
    %v742 = vsel %vm726, 1, 0
    %v743 = vsel %vm727, 1, 0
    %v744 = vsel %vm728, 1, 0
    %v745 = vsel %vm729, 1, 0
    %v746 = vsel %vm730, 1, 0
    %v747 = vsel %vm731, 1, 0
    %v748 = vsel %vm732, 1, 0
    %v749 = vsel %vm733, 1, 0
    %v750 = vsel %vm734, 1, 0
    %v751 = vsel %vm735, 1, 0
    %v752 = vsel %vm736, 1, 0
    %v753 = vsel %vm737, 1, 0
    %v754 = vsel %vm738, 1, 0
    %v755 = vsel %vm739, 1, 0
    %v756 = vsel %vm740, 1, 0
    %v757 = vcvt.s32.f32 %v741
    %v758 = vcvt.s32.f32 %v742
    %v759 = vcvt.s32.f32 %v743
    %v760 = vcvt.s32.f32 %v744
    %v761 = vcvt.s32.f32 %v745
    %v762 = vcvt.s32.f32 %v746
    %v763 = vcvt.s32.f32 %v747
    %v764 = vcvt.s32.f32 %v748
    %v765 = vcvt.s32.f32 %v749
    %v766 = vcvt.s32.f32 %v750
    %v767 = vcvt.s32.f32 %v751
    %v768 = vcvt.s32.f32 %v752
    %v769 = vcvt.s32.f32 %v753
    %v770 = vcvt.s32.f32 %v754
    %v771 = vcvt.s32.f32 %v755
    %v772 = vcvt.s32.f32 %v756
    %vm773 = vcmask 31744
    %v775 = vsel %vm773, %v757, 0
    %v778 = vsel %vm773, %v758, 0
    %v781 = vsel %vm773, %v759, 0
    %v784 = vsel %vm773, %v760, 0
    %v787 = vsel %vm773, %v761, 0
    %v790 = vsel %vm773, %v762, 0
    %v793 = vsel %vm773, %v763, 0
    %v796 = vsel %vm773, %v764, 0
    %v799 = vsel %vm773, %v765, 0
    %v802 = vsel %vm773, %v766, 0
    %v805 = vsel %vm773, %v767, 0
    %v808 = vsel %vm773, %v768, 0
    %v811 = vsel %vm773, %v769, 0
    %v814 = vsel %vm773, %v770, 0
    %v817 = vsel %vm773, %v771, 0
    %v820 = vsel %vm773, %v772, 0
    %vm822 = vcmask 1043456
    %v824 = vsel %vm822, %v660, 0
    %826 = vmatprep.subr.mxu0 0.0
    %827 = vmatpush1.msra.mxu0 0.0
    %828 = vmatprep.subr.mxu0 0.0
    %829 = vmatpush1.msra.mxu0 0.0
    %830 = vmatprep.subr.mxu0 0.0
    %831 = vmatpush1.msra.mxu0 0.0
    %832 = vmatprep.subr.mxu0 0.0
    %833 = vmatpush1.msra.mxu0 0.0
    %834 = vmatprep.subr.mxu0 0.0
    %835 = vmatpush1.msra.mxu0 0.0
    %836 = vmatprep.subr.mxu0 0.0
    %837 = vmatpush1.msra.mxu0 0.0
    %838 = vmatprep.subr.mxu0 0.0
    %839 = vmatpush1.msra.mxu0 0.0
    %840 = vmatprep.subr.mxu0 0.0
    %841 = vmatpush1.msra.mxu0 0.0
    %842 = vmatprep.subr.mxu0 0.0
    %843 = vmatpush1.msra.mxu0 0.0
    %844 = vmatprep.subr.mxu0 0.0
    %845 = vmatpush1.msra.mxu0 0.0
    %846 = vmatprep.subr.mxu0 0.0
    %847 = vmatpush1.msra.mxu0 0.0
    %848 = vmatprep.subr.mxu0 0.0
    %849 = vmatpush1.msra.mxu0 0.0
    %850 = vmatprep.subr.mxu0 0.0
    %851 = vmatpush1.msra.mxu0 0.0
    %852 = vmatprep.subr.mxu0 0.0
    %853 = vmatpush1.msra.mxu0 0.0
    %854 = vmatprep.subr.mxu0 0.0
    %855 = vmatpush1.msra.mxu0 0.0
    %856 = vmatprep.subr.mxu0 0.0
    %857 = vmatpush1.msra.mxu0 %v824
    %858 = vmatprep.subr.mxu0 0.0
    %859 = vmatpush2.msra.mxu0 0.0
    %860 = vmatprep.subr.mxu0 0.0
    %861 = vmatpush2.msra.mxu0 0.0
    %862 = vmatprep.subr.mxu0 0.0
    %863 = vmatpush2.msra.mxu0 0.0
    %864 = vmatprep.subr.mxu0 0.0
    %865 = vmatpush2.msra.mxu0 0.0
    %866 = vmatprep.subr.mxu0 0.0
    %867 = vmatpush2.msra.mxu0 0.0
    %868 = vmatprep.subr.mxu0 0.0
    %869 = vmatpush2.msra.mxu0 0.0
    %870 = vmatprep.subr.mxu0 0.0
    %871 = vmatpush2.msra.mxu0 0.0
    %872 = vmatprep.subr.mxu0 0.0
    %873 = vmatpush2.msra.mxu0 0.0
    %874 = vmatprep.subr.mxu0 0.0
    %875 = vmatpush2.msra.mxu0 0.0
    %876 = vmatprep.subr.mxu0 0.0
    %877 = vmatpush2.msra.mxu0 0.0
    %878 = vmatprep.subr.mxu0 0.0
    %879 = vmatpush2.msra.mxu0 0.0
    %880 = vmatprep.subr.mxu0 0.0
    %881 = vmatpush2.msra.mxu0 0.0
    %882 = vmatprep.subr.mxu0 0.0
    %883 = vmatpush2.msra.mxu0 0.0
    %884 = vmatprep.subr.mxu0 0.0
    %885 = vmatpush2.msra.mxu0 0.0
    %886 = vmatprep.subr.mxu0 0.0
    %887 = vmatpush2.msra.mxu0 0.0
    %888 = vmatprep.subr.mxu0 0.0
    %889 = vmatpush2.msra.mxu0 0.0
    %890 = vmatprep.mubr.f32.mxu0 0.0
    %891 = vmatmul.mubr.f32.gmra.mxu0 %v775
    %v892 = vpop.f32.mrf.mxu0
    %v893 = vadd.f32 0.0, %v892
    %v894 = vpop.f32.mrf.mxu0
    %895 = vmatprep.mubr.f32.mxu0 0.0
    %896 = vmatmul.mubr.f32.gmra.mxu0 %v778
    %v897 = vpop.f32.mrf.mxu0
    %v898 = vadd.f32 0.0, %v897
    %v899 = vpop.f32.mrf.mxu0
    %900 = vmatprep.mubr.f32.mxu0 0.0
    %901 = vmatmul.mubr.f32.gmra.mxu0 %v781
    %v902 = vpop.f32.mrf.mxu0
    %v903 = vadd.f32 0.0, %v902
    %v904 = vpop.f32.mrf.mxu0
    %905 = vmatprep.mubr.f32.mxu0 0.0
    %906 = vmatmul.mubr.f32.gmra.mxu0 %v784
    %v907 = vpop.f32.mrf.mxu0
    %v908 = vadd.f32 0.0, %v907
    %v909 = vpop.f32.mrf.mxu0
    %910 = vmatprep.mubr.f32.mxu0 0.0
    %911 = vmatmul.mubr.f32.gmra.mxu0 %v787
    %v912 = vpop.f32.mrf.mxu0
    %v913 = vadd.f32 0.0, %v912
    %v914 = vpop.f32.mrf.mxu0
    %915 = vmatprep.mubr.f32.mxu0 0.0
    %916 = vmatmul.mubr.f32.gmra.mxu0 %v790
    %v917 = vpop.f32.mrf.mxu0
    %v918 = vadd.f32 0.0, %v917
    %v919 = vpop.f32.mrf.mxu0
    %920 = vmatprep.mubr.f32.mxu0 0.0
    %921 = vmatmul.mubr.f32.gmra.mxu0 %v793
    %v922 = vpop.f32.mrf.mxu0
    %v923 = vadd.f32 0.0, %v922
    %v924 = vpop.f32.mrf.mxu0
    %925 = vmatprep.mubr.f32.mxu0 0.0
    %926 = vmatmul.mubr.f32.gmra.mxu0 %v796
    %v927 = vpop.f32.mrf.mxu0
    %v928 = vadd.f32 0.0, %v927
    %v929 = vpop.f32.mrf.mxu0
    %930 = vmatprep.mubr.f32.mxu0 0.0
    %931 = vmatmul.mubr.f32.gmra.mxu0 %v799
    %v932 = vpop.f32.mrf.mxu0
    %v933 = vadd.f32 0.0, %v932
    %v934 = vpop.f32.mrf.mxu0
    %935 = vmatprep.mubr.f32.mxu0 0.0
    %936 = vmatmul.mubr.f32.gmra.mxu0 %v802
    %v937 = vpop.f32.mrf.mxu0
    %v938 = vadd.f32 0.0, %v937
    %v939 = vpop.f32.mrf.mxu0
    %940 = vmatprep.mubr.f32.mxu0 0.0
    %941 = vmatmul.mubr.f32.gmra.mxu0 %v805
    %v942 = vpop.f32.mrf.mxu0
    %v943 = vadd.f32 0.0, %v942
    %v944 = vpop.f32.mrf.mxu0
    %945 = vmatprep.mubr.f32.mxu0 0.0
    %946 = vmatmul.mubr.f32.gmra.mxu0 %v808
    %v947 = vpop.f32.mrf.mxu0
    %v948 = vadd.f32 0.0, %v947
    %v949 = vpop.f32.mrf.mxu0
    %950 = vmatprep.mubr.f32.mxu0 0.0
    %951 = vmatmul.mubr.f32.gmra.mxu0 %v811
    %v952 = vpop.f32.mrf.mxu0
    %v953 = vadd.f32 0.0, %v952
    %v954 = vpop.f32.mrf.mxu0
    %955 = vmatprep.mubr.f32.mxu0 0.0
    %956 = vmatmul.mubr.f32.gmra.mxu0 %v814
    %v957 = vpop.f32.mrf.mxu0
    %v958 = vadd.f32 0.0, %v957
    %v959 = vpop.f32.mrf.mxu0
    %960 = vmatprep.mubr.f32.mxu0 0.0
    %961 = vmatmul.mubr.f32.gmra.mxu0 %v817
    %v962 = vpop.f32.mrf.mxu0
    %v963 = vadd.f32 0.0, %v962
    %v964 = vpop.f32.mrf.mxu0
    %965 = vmatprep.mubr.f32.mxu0 0.0
    %966 = vmatmul.mubr.f32.gmra.mxu0 %v820
    %v967 = vpop.f32.mrf.mxu0
    %v968 = vadd.f32 0.0, %v967
    %v969 = vpop.f32.mrf.mxu0
    %970 = vdwg.mxu0
    %v971 = vpack.c.bf16 %v44, %v43
    %v972 = vpack.c.bf16 %v46, %v45
    %v973 = vld [vmem:[%s4] sm:$0xff]
    %v974 = vld [vmem:[%s4 + $0x8] sm:$0xff]
    %v975 = vld [vmem:[%s4 + $0x10] sm:$0xff]
    %v976 = vld [vmem:[%s4 + $0x18] sm:$0xff]
    %v977 = vpack.c.bf16 %v974, %v973
    %v978 = vpack.c.bf16 %v976, %v975
    %v979 = vld [vmem:[#allocation2] sm:$0x1]
    %981 = vset.pattern.permute.xlu0 0
    %982 = vperm.xlu0 %981, %v979
    %v983 = vpop.permute.xlu0 %982
    %v985 = vlaneseq
    %v986 = vshrl.u32 %v985, 7
    %v987 = vsub.s32 0, %v986
    %v988 = vrot.slane %v983, %v987
    %989 = vxpose.xlu0.c.b16.start [1/8] %v977, 128
    %990 = vxpose.xlu0.c.b16.cont [2/8] %v978, 128
    %991 = vxpose.xlu0.c.b16.cont [3/8] 0, 128
    %992 = vxpose.xlu0.c.b16.cont [4/8] 0, 128
    %993 = vxpose.xlu0.c.b16.cont [5/8] 0, 128
    %994 = vxpose.xlu0.c.b16.cont [6/8] 0, 128
    %995 = vxpose.xlu0.c.b16.cont [7/8] 0, 128
    %996 = vxpose.xlu0.c.b16.end [8/8] 0, 128
    %v997 = vpop.trf.xlu0
    %v998 = vpop.trf.xlu0
    %v999 = vpop.trf.xlu0
    %v1000 = vpop.trf.xlu0
    %v1001 = vpop.trf.xlu0
    %v1002 = vpop.trf.xlu0
    %v1003 = vpop.trf.xlu0
    %v1004 = vpop.trf.xlu0
    %v1006 = vsel %vm273, %v997, 0
    %v1009 = vsel %vm273, %v971, 0
    %v1012 = vsel %vm273, %v972, 0
    %1014 = vmatprep.subr.bf16.mxu0 0
    %1015 = vmatpush1.bf16.xpose.msra.mxu0 0
    %1016 = vmatprep.subr.bf16.mxu0 0
    %1017 = vmatpush1.bf16.xpose.msra.mxu0 0
    %1018 = vmatprep.subr.bf16.mxu0 0
    %1019 = vmatpush1.bf16.xpose.msra.mxu0 0
    %1020 = vmatprep.subr.bf16.mxu0 0
    %1021 = vmatpush1.bf16.xpose.msra.mxu0 0
    %1022 = vmatprep.subr.bf16.mxu0 0
    %1023 = vmatpush1.bf16.xpose.msra.mxu0 0
    %1024 = vmatprep.subr.bf16.mxu0 0
    %1025 = vmatpush1.bf16.xpose.msra.mxu0 0
    %1026 = vmatprep.subr.bf16.mxu0 0
    %1027 = vmatpush1.bf16.xpose.msra.mxu0 %v1012
    %1028 = vmatprep.subr.bf16.mxu0 0
    %1029 = vmatpush1.bf16.xpose.msra.mxu0 %v1009
    %1030 = vmatprep.subr.bf16.mxu0 0
    %1031 = vmatpush2.bf16.xpose.msra.mxu0 0
    %1032 = vmatprep.subr.bf16.mxu0 0
    %1033 = vmatpush2.bf16.xpose.msra.mxu0 0
    %1034 = vmatprep.subr.bf16.mxu0 0
    %1035 = vmatpush2.bf16.xpose.msra.mxu0 0
    %1036 = vmatprep.subr.bf16.mxu0 0
    %1037 = vmatpush2.bf16.xpose.msra.mxu0 0
    %1038 = vmatprep.subr.bf16.mxu0 0
    %1039 = vmatpush2.bf16.xpose.msra.mxu0 0
    %1040 = vmatprep.subr.bf16.mxu0 0
    %1041 = vmatpush2.bf16.xpose.msra.mxu0 0
    %1042 = vmatprep.subr.bf16.mxu0 0
    %1043 = vmatpush2.bf16.xpose.msra.mxu0 0
    %1044 = vmatprep.subr.bf16.mxu0 0
    %1045 = vmatpush2.bf16.xpose.msra.mxu0 0
    %1046 = vmatprep.mubr.bf16.mxu0 0
    %1047 = vmatmul.mubr.bf16.gmra.mxu0 %v1006
    %v1048 = vpop.f32.mrf.mxu0
    %v1049 = vadd.f32 %v988, %v1048
    %v1050 = vpop.f32.mrf.mxu0
    %v1051 = vpop.f32.mrf.mxu0
    %v1052 = vpop.f32.mrf.mxu0
    %1053 = vdwg.mxu0
    %vm1054 = vcmp.ge.s32.totalorder %v80, %v83
    %vm1055 = vcmp.ge.s32.totalorder %v80, %v86
    %vm1056 = vcmp.ge.s32.totalorder %v80, %v89
    %vm1057 = vcmp.ge.s32.totalorder %v80, %v92
    %vm1058 = vcmp.ge.s32.totalorder %v80, %v95
    %vm1059 = vcmp.ge.s32.totalorder %v80, %v98
    %vm1060 = vcmp.ge.s32.totalorder %v80, %v101
    %vm1061 = vcmp.ge.s32.totalorder %v80, %v104
    %vm1062 = vcmp.ge.s32.totalorder %v80, %v107
    %vm1063 = vcmp.ge.s32.totalorder %v80, %v110
    %vm1064 = vcmp.ge.s32.totalorder %v80, %v113
    %vm1065 = vcmp.ge.s32.totalorder %v80, %v116
    %vm1066 = vcmp.ge.s32.totalorder %v80, %v119
    %vm1067 = vcmp.ge.s32.totalorder %v80, %v122
    %vm1068 = vcmp.ge.s32.totalorder %v80, %v125
    %vm1069 = vcmp.ge.s32.totalorder %v80, %v128
    %vm1070 = vcmp.le.s32.totalorder %v80, %v179
    %vm1071 = vcmp.le.s32.totalorder %v80, %v182
    %vm1072 = vcmp.le.s32.totalorder %v80, %v185
    %vm1073 = vcmp.le.s32.totalorder %v80, %v188
    %vm1074 = vcmp.le.s32.totalorder %v80, %v191
    %vm1075 = vcmp.le.s32.totalorder %v80, %v194
    %vm1076 = vcmp.le.s32.totalorder %v80, %v197
    %vm1077 = vcmp.le.s32.totalorder %v80, %v200
    %vm1078 = vcmp.le.s32.totalorder %v80, %v203
    %vm1079 = vcmp.le.s32.totalorder %v80, %v206
    %vm1080 = vcmp.le.s32.totalorder %v80, %v209
    %vm1081 = vcmp.le.s32.totalorder %v80, %v212
    %vm1082 = vcmp.le.s32.totalorder %v80, %v215
    %vm1083 = vcmp.le.s32.totalorder %v80, %v218
    %vm1084 = vcmp.le.s32.totalorder %v80, %v221
    %vm1085 = vcmp.le.s32.totalorder %v80, %v224
    %vm1086 = vmand %vm1054, %vm1070
    %vm1087 = vmand %vm1055, %vm1071
    %vm1088 = vmand %vm1056, %vm1072
    %vm1089 = vmand %vm1057, %vm1073
    %vm1090 = vmand %vm1058, %vm1074
    %vm1091 = vmand %vm1059, %vm1075
    %vm1092 = vmand %vm1060, %vm1076
    %vm1093 = vmand %vm1061, %vm1077
    %vm1094 = vmand %vm1062, %vm1078
    %vm1095 = vmand %vm1063, %vm1079
    %vm1096 = vmand %vm1064, %vm1080
    %vm1097 = vmand %vm1065, %vm1081
    %vm1098 = vmand %vm1066, %vm1082
    %vm1099 = vmand %vm1067, %vm1083
    %vm1100 = vmand %vm1068, %vm1084
    %vm1101 = vmand %vm1069, %vm1085
    %v1102 = vsel %vm1086, 0.0, -inf
    %v1103 = vsel %vm1087, 0.0, -inf
    %v1104 = vsel %vm1088, 0.0, -inf
    %v1105 = vsel %vm1089, 0.0, -inf
    %v1106 = vsel %vm1090, 0.0, -inf
    %v1107 = vsel %vm1091, 0.0, -inf
    %v1108 = vsel %vm1092, 0.0, -inf
    %v1109 = vsel %vm1093, 0.0, -inf
    %v1110 = vsel %vm1094, 0.0, -inf
    %v1111 = vsel %vm1095, 0.0, -inf
    %v1112 = vsel %vm1096, 0.0, -inf
    %v1113 = vsel %vm1097, 0.0, -inf
    %v1114 = vsel %vm1098, 0.0, -inf
    %v1115 = vsel %vm1099, 0.0, -inf
    %v1116 = vsel %vm1100, 0.0, -inf
    %v1117 = vsel %vm1101, 0.0, -inf
    %v1118 = vlaneseq
    %v1119 = vshrl.u32 %v1118, 7
    %v1120 = vsub.s32 0, %v1119
    %v1121 = vrot.slane %v1049, %v1120
    %v1122 = vadd.f32 %v1121, %v1102
    %v1123 = vadd.f32 %v1121, %v1103
    %v1124 = vadd.f32 %v1121, %v1104
    %v1125 = vadd.f32 %v1121, %v1105
    %v1126 = vadd.f32 %v1121, %v1106
    %v1127 = vadd.f32 %v1121, %v1107
    %v1128 = vadd.f32 %v1121, %v1108
    %v1129 = vadd.f32 %v1121, %v1109
    %v1130 = vadd.f32 %v1121, %v1110
    %v1131 = vadd.f32 %v1121, %v1111
    %v1132 = vadd.f32 %v1121, %v1112
    %v1133 = vadd.f32 %v1121, %v1113
    %v1134 = vadd.f32 %v1121, %v1114
    %v1135 = vadd.f32 %v1121, %v1115
    %v1136 = vadd.f32 %v1121, %v1116
    %v1137 = vadd.f32 %v1121, %v1117
    %v1138 = vsel %vm273, %v1122, -inf
    %1139 = vmax.xlane.f32.xlu0 %v1138
    %v1140 = vpop.xlane.xlu0 %1139
    %v1141 = vsel %vm273, %v1123, -inf
    %1142 = vmax.xlane.f32.xlu0 %v1141
    %v1143 = vpop.xlane.xlu0 %1142
    %v1144 = vsel %vm273, %v1124, -inf
    %1145 = vmax.xlane.f32.xlu0 %v1144
    %v1146 = vpop.xlane.xlu0 %1145
    %v1147 = vsel %vm273, %v1125, -inf
    %1148 = vmax.xlane.f32.xlu0 %v1147
    %v1149 = vpop.xlane.xlu0 %1148
    %v1150 = vsel %vm273, %v1126, -inf
    %1151 = vmax.xlane.f32.xlu0 %v1150
    %v1152 = vpop.xlane.xlu0 %1151
    %v1153 = vsel %vm273, %v1127, -inf
    %1154 = vmax.xlane.f32.xlu0 %v1153
    %v1155 = vpop.xlane.xlu0 %1154
    %v1156 = vsel %vm273, %v1128, -inf
    %1157 = vmax.xlane.f32.xlu0 %v1156
    %v1158 = vpop.xlane.xlu0 %1157
    %v1159 = vsel %vm273, %v1129, -inf
    %1160 = vmax.xlane.f32.xlu0 %v1159
    %v1161 = vpop.xlane.xlu0 %1160
    %v1162 = vsel %vm273, %v1130, -inf
    %1163 = vmax.xlane.f32.xlu0 %v1162
    %v1164 = vpop.xlane.xlu0 %1163
    %v1165 = vsel %vm273, %v1131, -inf
    %1166 = vmax.xlane.f32.xlu0 %v1165
    %v1167 = vpop.xlane.xlu0 %1166
    %v1168 = vsel %vm273, %v1132, -inf
    %1169 = vmax.xlane.f32.xlu0 %v1168
    %v1170 = vpop.xlane.xlu0 %1169
    %v1171 = vsel %vm273, %v1133, -inf
    %1172 = vmax.xlane.f32.xlu0 %v1171
    %v1173 = vpop.xlane.xlu0 %1172
    %v1174 = vsel %vm273, %v1134, -inf
    %1175 = vmax.xlane.f32.xlu0 %v1174
    %v1176 = vpop.xlane.xlu0 %1175
    %v1177 = vsel %vm273, %v1135, -inf
    %1178 = vmax.xlane.f32.xlu0 %v1177
    %v1179 = vpop.xlane.xlu0 %1178
    %v1180 = vsel %vm273, %v1136, -inf
    %1181 = vmax.xlane.f32.xlu0 %v1180
    %v1182 = vpop.xlane.xlu0 %1181
    %v1183 = vsel %vm273, %v1137, -inf
    %1184 = vmax.xlane.f32.xlu0 %v1183
    %v1185 = vpop.xlane.xlu0 %1184
    %v1186 = vsub.f32 %v1122, %v1140
    %v1187 = vsub.f32 %v1123, %v1143
    %v1188 = vsub.f32 %v1124, %v1146
    %v1189 = vsub.f32 %v1125, %v1149
    %v1190 = vsub.f32 %v1126, %v1152
    %v1191 = vsub.f32 %v1127, %v1155
    %v1192 = vsub.f32 %v1128, %v1158
    %v1193 = vsub.f32 %v1129, %v1161
    %v1194 = vsub.f32 %v1130, %v1164
    %v1195 = vsub.f32 %v1131, %v1167
    %v1196 = vsub.f32 %v1132, %v1170
    %v1197 = vsub.f32 %v1133, %v1173
    %v1198 = vsub.f32 %v1134, %v1176
    %v1199 = vsub.f32 %v1135, %v1179
    %v1200 = vsub.f32 %v1136, %v1182
    %v1201 = vsub.f32 %v1137, %v1185
    %v1202 = vmul.f32 %v1186, 1.442695
    %v1203 = vpow.pop %v1202
    %v1204 = vmul.f32 %v1187, 1.442695
    %v1205 = vpow.pop %v1204
    %v1206 = vmul.f32 %v1188, 1.442695
    %v1207 = vpow.pop %v1206
    %v1208 = vmul.f32 %v1189, 1.442695
    %v1209 = vpow.pop %v1208
    %v1210 = vmul.f32 %v1190, 1.442695
    %v1211 = vpow.pop %v1210
    %v1212 = vmul.f32 %v1191, 1.442695
    %v1213 = vpow.pop %v1212
    %v1214 = vmul.f32 %v1192, 1.442695
    %v1215 = vpow.pop %v1214
    %v1216 = vmul.f32 %v1193, 1.442695
    %v1217 = vpow.pop %v1216
    %v1218 = vmul.f32 %v1194, 1.442695
    %v1219 = vpow.pop %v1218
    %v1220 = vmul.f32 %v1195, 1.442695
    %v1221 = vpow.pop %v1220
    %v1222 = vmul.f32 %v1196, 1.442695
    %v1223 = vpow.pop %v1222
    %v1224 = vmul.f32 %v1197, 1.442695
    %v1225 = vpow.pop %v1224
    %v1226 = vmul.f32 %v1198, 1.442695
    %v1227 = vpow.pop %v1226
    %v1228 = vmul.f32 %v1199, 1.442695
    %v1229 = vpow.pop %v1228
    %v1230 = vmul.f32 %v1200, 1.442695
    %v1231 = vpow.pop %v1230
    %v1232 = vmul.f32 %v1201, 1.442695
    %v1233 = vpow.pop %v1232
    %v1234 = vsel %vm273, %v1203, 0.0
    %1235 = vadd.xlane.f32.xlu0 %v1234
    %v1236 = vpop.xlane.xlu0 %1235
    %v1237 = vsel %vm273, %v1205, 0.0
    %1238 = vadd.xlane.f32.xlu0 %v1237
    %v1239 = vpop.xlane.xlu0 %1238
    %v1240 = vsel %vm273, %v1207, 0.0
    %1241 = vadd.xlane.f32.xlu0 %v1240
    %v1242 = vpop.xlane.xlu0 %1241
    %v1243 = vsel %vm273, %v1209, 0.0
    %1244 = vadd.xlane.f32.xlu0 %v1243
    %v1245 = vpop.xlane.xlu0 %1244
    %v1246 = vsel %vm273, %v1211, 0.0
    %1247 = vadd.xlane.f32.xlu0 %v1246
    %v1248 = vpop.xlane.xlu0 %1247
    %v1249 = vsel %vm273, %v1213, 0.0
    %1250 = vadd.xlane.f32.xlu0 %v1249
    %v1251 = vpop.xlane.xlu0 %1250
    %v1252 = vsel %vm273, %v1215, 0.0
    %1253 = vadd.xlane.f32.xlu0 %v1252
    %v1254 = vpop.xlane.xlu0 %1253
    %v1255 = vsel %vm273, %v1217, 0.0
    %1256 = vadd.xlane.f32.xlu0 %v1255
    %v1257 = vpop.xlane.xlu0 %1256
    %v1258 = vsel %vm273, %v1219, 0.0
    %1259 = vadd.xlane.f32.xlu0 %v1258
    %v1260 = vpop.xlane.xlu0 %1259
    %v1261 = vsel %vm273, %v1221, 0.0
    %1262 = vadd.xlane.f32.xlu0 %v1261
    %v1263 = vpop.xlane.xlu0 %1262
    %v1264 = vsel %vm273, %v1223, 0.0
    %1265 = vadd.xlane.f32.xlu0 %v1264
    %v1266 = vpop.xlane.xlu0 %1265
    %v1267 = vsel %vm273, %v1225, 0.0
    %1268 = vadd.xlane.f32.xlu0 %v1267
    %v1269 = vpop.xlane.xlu0 %1268
    %v1270 = vsel %vm273, %v1227, 0.0
    %1271 = vadd.xlane.f32.xlu0 %v1270
    %v1272 = vpop.xlane.xlu0 %1271
    %v1273 = vsel %vm273, %v1229, 0.0
    %1274 = vadd.xlane.f32.xlu0 %v1273
    %v1275 = vpop.xlane.xlu0 %1274
    %v1276 = vsel %vm273, %v1231, 0.0
    %1277 = vadd.xlane.f32.xlu0 %v1276
    %v1278 = vpop.xlane.xlu0 %1277
    %v1279 = vsel %vm273, %v1233, 0.0
    %1280 = vadd.xlane.f32.xlu0 %v1279
    %v1281 = vpop.xlane.xlu0 %1280
    %v1282 = vrcp.pop %v1236
    %v1283 = vrcp.pop %v1239
    %v1284 = vrcp.pop %v1242
    %v1285 = vrcp.pop %v1245
    %v1286 = vrcp.pop %v1248
    %v1287 = vrcp.pop %v1251
    %v1288 = vrcp.pop %v1254
    %v1289 = vrcp.pop %v1257
    %v1290 = vrcp.pop %v1260
    %v1291 = vrcp.pop %v1263
    %v1292 = vrcp.pop %v1266
    %v1293 = vrcp.pop %v1269
    %v1294 = vrcp.pop %v1272
    %v1295 = vrcp.pop %v1275
    %v1296 = vrcp.pop %v1278
    %v1297 = vrcp.pop %v1281
    %v1298 = vmul.f32 %v1203, %v1282
    %v1299 = vmul.f32 %v1205, %v1283
    %v1300 = vmul.f32 %v1207, %v1284
    %v1301 = vmul.f32 %v1209, %v1285
    %v1302 = vmul.f32 %v1211, %v1286
    %v1303 = vmul.f32 %v1213, %v1287
    %v1304 = vmul.f32 %v1215, %v1288
    %v1305 = vmul.f32 %v1217, %v1289
    %v1306 = vmul.f32 %v1219, %v1290
    %v1307 = vmul.f32 %v1221, %v1291
    %v1308 = vmul.f32 %v1223, %v1292
    %v1309 = vmul.f32 %v1225, %v1293
    %v1310 = vmul.f32 %v1227, %v1294
    %v1311 = vmul.f32 %v1229, %v1295
    %v1312 = vmul.f32 %v1231, %v1296
    %v1313 = vmul.f32 %v1233, %v1297
    %v1314 = vpack.c.bf16 %v1299, %v1298
    %v1315 = vpack.c.bf16 %v1301, %v1300
    %v1316 = vpack.c.bf16 %v1303, %v1302
    %v1317 = vpack.c.bf16 %v1305, %v1304
    %v1318 = vpack.c.bf16 %v1307, %v1306
    %v1319 = vpack.c.bf16 %v1309, %v1308
    %v1320 = vpack.c.bf16 %v1311, %v1310
    %v1321 = vpack.c.bf16 %v1313, %v1312
    %v1323 = vsel %vm273, %v1314, 0
    %v1326 = vsel %vm273, %v1315, 0
    %v1329 = vsel %vm273, %v1316, 0
    %v1332 = vsel %vm273, %v1317, 0
    %v1335 = vsel %vm273, %v1318, 0
    %v1338 = vsel %vm273, %v1319, 0
    %v1341 = vsel %vm273, %v1320, 0
    %v1344 = vsel %vm273, %v1321, 0
    %1346 = vmatprep.subr.bf16.mxu0 0
    %1347 = vmatpush1.bf16.msra.mxu0 0
    %1348 = vmatprep.subr.bf16.mxu0 0
    %1349 = vmatpush1.bf16.msra.mxu0 0
    %1350 = vmatprep.subr.bf16.mxu0 0
    %1351 = vmatpush1.bf16.msra.mxu0 0
    %1352 = vmatprep.subr.bf16.mxu0 0
    %1353 = vmatpush1.bf16.msra.mxu0 0
    %1354 = vmatprep.subr.bf16.mxu0 0
    %1355 = vmatpush1.bf16.msra.mxu0 0
    %1356 = vmatprep.subr.bf16.mxu0 0
    %1357 = vmatpush1.bf16.msra.mxu0 0
    %1358 = vmatprep.subr.bf16.mxu0 0
    %1359 = vmatpush1.bf16.msra.mxu0 %v972
    %1360 = vmatprep.subr.bf16.mxu0 0
    %1361 = vmatpush1.bf16.msra.mxu0 %v971
    %1362 = vmatprep.subr.bf16.mxu0 0
    %1363 = vmatpush2.bf16.msra.mxu0 0
    %1364 = vmatprep.subr.bf16.mxu0 0
    %1365 = vmatpush2.bf16.msra.mxu0 0
    %1366 = vmatprep.subr.bf16.mxu0 0
    %1367 = vmatpush2.bf16.msra.mxu0 0
    %1368 = vmatprep.subr.bf16.mxu0 0
    %1369 = vmatpush2.bf16.msra.mxu0 0
    %1370 = vmatprep.subr.bf16.mxu0 0
    %1371 = vmatpush2.bf16.msra.mxu0 0
    %1372 = vmatprep.subr.bf16.mxu0 0
    %1373 = vmatpush2.bf16.msra.mxu0 0
    %1374 = vmatprep.subr.bf16.mxu0 0
    %1375 = vmatpush2.bf16.msra.mxu0 0
    %1376 = vmatprep.subr.bf16.mxu0 0
    %1377 = vmatpush2.bf16.msra.mxu0 0
    %1378 = vmatprep.mubr.bf16.mxu0 0
    %1379 = vmatmul.mubr.bf16.gmra.mxu0 %v1323
    %v1380 = vpop.f32.mrf.mxu0
    %v1381 = vadd.f32 0.0, %v1380
    %v1382 = vpop.f32.mrf.mxu0
    %v1383 = vpop.f32.mrf.mxu0
    %v1384 = vadd.f32 0.0, %v1383
    %v1385 = vpop.f32.mrf.mxu0
    %1386 = vmatprep.mubr.bf16.mxu0 0
    %1387 = vmatmul.mubr.bf16.gmra.mxu0 %v1326
    %v1388 = vpop.f32.mrf.mxu0
    %v1389 = vadd.f32 0.0, %v1388
    %v1390 = vpop.f32.mrf.mxu0
    %v1391 = vpop.f32.mrf.mxu0
    %v1392 = vadd.f32 0.0, %v1391
    %v1393 = vpop.f32.mrf.mxu0
    %1394 = vmatprep.mubr.bf16.mxu0 0
    %1395 = vmatmul.mubr.bf16.gmra.mxu0 %v1329
    %v1396 = vpop.f32.mrf.mxu0
    %v1397 = vadd.f32 0.0, %v1396
    %v1398 = vpop.f32.mrf.mxu0
    %v1399 = vpop.f32.mrf.mxu0
    %v1400 = vadd.f32 0.0, %v1399
    %v1401 = vpop.f32.mrf.mxu0
    %1402 = vmatprep.mubr.bf16.mxu0 0
    %1403 = vmatmul.mubr.bf16.gmra.mxu0 %v1332
    %v1404 = vpop.f32.mrf.mxu0
    %v1405 = vadd.f32 0.0, %v1404
    %v1406 = vpop.f32.mrf.mxu0
    %v1407 = vpop.f32.mrf.mxu0
    %v1408 = vadd.f32 0.0, %v1407
    %v1409 = vpop.f32.mrf.mxu0
    %1410 = vmatprep.mubr.bf16.mxu0 0
    %1411 = vmatmul.mubr.bf16.gmra.mxu0 %v1335
    %v1412 = vpop.f32.mrf.mxu0
    %v1413 = vadd.f32 0.0, %v1412
    %v1414 = vpop.f32.mrf.mxu0
    %v1415 = vpop.f32.mrf.mxu0
    %v1416 = vadd.f32 0.0, %v1415
    %v1417 = vpop.f32.mrf.mxu0
    %1418 = vmatprep.mubr.bf16.mxu0 0
    %1419 = vmatmul.mubr.bf16.gmra.mxu0 %v1338
    %v1420 = vpop.f32.mrf.mxu0
    %v1421 = vadd.f32 0.0, %v1420
    %v1422 = vpop.f32.mrf.mxu0
    %v1423 = vpop.f32.mrf.mxu0
    %v1424 = vadd.f32 0.0, %v1423
    %v1425 = vpop.f32.mrf.mxu0
    %1426 = vmatprep.mubr.bf16.mxu0 0
    %1427 = vmatmul.mubr.bf16.gmra.mxu0 %v1341
    %v1428 = vpop.f32.mrf.mxu0
    %v1429 = vadd.f32 0.0, %v1428
    %v1430 = vpop.f32.mrf.mxu0
    %v1431 = vpop.f32.mrf.mxu0
    %v1432 = vadd.f32 0.0, %v1431
    %v1433 = vpop.f32.mrf.mxu0
    %1434 = vmatprep.mubr.bf16.mxu0 0
    %1435 = vmatmul.mubr.bf16.gmra.mxu0 %v1344
    %v1436 = vpop.f32.mrf.mxu0
    %v1437 = vadd.f32 0.0, %v1436
    %v1438 = vpop.f32.mrf.mxu0
    %v1439 = vpop.f32.mrf.mxu0
    %v1440 = vadd.f32 0.0, %v1439
    %v1441 = vpop.f32.mrf.mxu0
    %1442 = vdwg.mxu0
    %1459 = vrot.lane.b32.xlu0 %v582, 32
    %v1460 = vpop.permute.xlu0 %1459
    %1461 = vrot.lane.b32.xlu0 %v587, 32
    %v1462 = vpop.permute.xlu0 %1461
    %1463 = vrot.lane.b32.xlu0 %v592, 32
    %v1464 = vpop.permute.xlu0 %1463
    %1465 = vrot.lane.b32.xlu0 %v597, 32
    %v1466 = vpop.permute.xlu0 %1465
    %1467 = vrot.lane.b32.xlu0 %v602, 32
    %v1468 = vpop.permute.xlu0 %1467
    %1469 = vrot.lane.b32.xlu0 %v607, 32
    %v1470 = vpop.permute.xlu0 %1469
    %1471 = vrot.lane.b32.xlu0 %v612, 32
    %v1472 = vpop.permute.xlu0 %1471
    %1473 = vrot.lane.b32.xlu0 %v617, 32
    %v1474 = vpop.permute.xlu0 %1473
    %1475 = vrot.lane.b32.xlu0 %v622, 32
    %v1476 = vpop.permute.xlu0 %1475
    %1477 = vrot.lane.b32.xlu0 %v627, 32
    %v1478 = vpop.permute.xlu0 %1477
    %1479 = vrot.lane.b32.xlu0 %v632, 32
    %v1480 = vpop.permute.xlu0 %1479
    %1481 = vrot.lane.b32.xlu0 %v637, 32
    %v1482 = vpop.permute.xlu0 %1481
    %1483 = vrot.lane.b32.xlu0 %v642, 32
    %v1484 = vpop.permute.xlu0 %1483
    %1485 = vrot.lane.b32.xlu0 %v647, 32
    %v1486 = vpop.permute.xlu0 %1485
    %1487 = vrot.lane.b32.xlu0 %v652, 32
    %v1488 = vpop.permute.xlu0 %1487
    %1489 = vrot.lane.b32.xlu0 %v657, 32
    %v1490 = vpop.permute.xlu0 %1489
    %1523 = vrot.lane.b32.xlu0 %v893, 64
    %v1524 = vpop.permute.xlu0 %1523
    %1525 = vrot.lane.b32.xlu0 %v898, 64
    %v1526 = vpop.permute.xlu0 %1525
    %1527 = vrot.lane.b32.xlu0 %v903, 64
    %v1528 = vpop.permute.xlu0 %1527
    %1529 = vrot.lane.b32.xlu0 %v908, 64
    %v1530 = vpop.permute.xlu0 %1529
    %1531 = vrot.lane.b32.xlu0 %v913, 64
    %v1532 = vpop.permute.xlu0 %1531
    %1533 = vrot.lane.b32.xlu0 %v918, 64
    %v1534 = vpop.permute.xlu0 %1533
    %1535 = vrot.lane.b32.xlu0 %v923, 64
    %v1536 = vpop.permute.xlu0 %1535
    %1537 = vrot.lane.b32.xlu0 %v928, 64
    %v1538 = vpop.permute.xlu0 %1537
    %1539 = vrot.lane.b32.xlu0 %v933, 64
    %v1540 = vpop.permute.xlu0 %1539
    %1541 = vrot.lane.b32.xlu0 %v938, 64
    %v1542 = vpop.permute.xlu0 %1541
    %1543 = vrot.lane.b32.xlu0 %v943, 64
    %v1544 = vpop.permute.xlu0 %1543
    %1545 = vrot.lane.b32.xlu0 %v948, 64
    %v1546 = vpop.permute.xlu0 %1545
    %1547 = vrot.lane.b32.xlu0 %v953, 64
    %v1548 = vpop.permute.xlu0 %1547
    %1549 = vrot.lane.b32.xlu0 %v958, 64
    %v1550 = vpop.permute.xlu0 %1549
    %1551 = vrot.lane.b32.xlu0 %v963, 64
    %v1552 = vpop.permute.xlu0 %1551
    %1553 = vrot.lane.b32.xlu0 %v968, 64
    %v1554 = vpop.permute.xlu0 %1553
    %1587 = vrot.lane.b32.xlu0 %v1381, 72
    %v1588 = vpop.permute.xlu0 %1587
    %1589 = vrot.lane.b32.xlu0 %v1384, 72
    %v1590 = vpop.permute.xlu0 %1589
    %1591 = vrot.lane.b32.xlu0 %v1389, 72
    %v1592 = vpop.permute.xlu0 %1591
    %1593 = vrot.lane.b32.xlu0 %v1392, 72
    %v1594 = vpop.permute.xlu0 %1593
    %1595 = vrot.lane.b32.xlu0 %v1397, 72
    %v1596 = vpop.permute.xlu0 %1595
    %1597 = vrot.lane.b32.xlu0 %v1400, 72
    %v1598 = vpop.permute.xlu0 %1597
    %1599 = vrot.lane.b32.xlu0 %v1405, 72
    %v1600 = vpop.permute.xlu0 %1599
    %1601 = vrot.lane.b32.xlu0 %v1408, 72
    %v1602 = vpop.permute.xlu0 %1601
    %1603 = vrot.lane.b32.xlu0 %v1413, 72
    %v1604 = vpop.permute.xlu0 %1603
    %1605 = vrot.lane.b32.xlu0 %v1416, 72
    %v1606 = vpop.permute.xlu0 %1605
    %1607 = vrot.lane.b32.xlu0 %v1421, 72
    %v1608 = vpop.permute.xlu0 %1607
    %1609 = vrot.lane.b32.xlu0 %v1424, 72
    %v1610 = vpop.permute.xlu0 %1609
    %1611 = vrot.lane.b32.xlu0 %v1429, 72
    %v1612 = vpop.permute.xlu0 %1611
    %1613 = vrot.lane.b32.xlu0 %v1432, 72
    %v1614 = vpop.permute.xlu0 %1613
    %1615 = vrot.lane.b32.xlu0 %v1437, 72
    %v1616 = vpop.permute.xlu0 %1615
    %1617 = vrot.lane.b32.xlu0 %v1440, 72
    %v1618 = vpop.permute.xlu0 %1617
    %v1635 = vsel %vm273, %v389, %v1460
    %v1636 = vsel %vm273, %v394, %v1462
    %v1637 = vsel %vm273, %v399, %v1464
    %v1638 = vsel %vm273, %v404, %v1466
    %v1639 = vsel %vm273, %v409, %v1468
    %v1640 = vsel %vm273, %v414, %v1470
    %v1641 = vsel %vm273, %v419, %v1472
    %v1642 = vsel %vm273, %v424, %v1474
    %v1643 = vsel %vm273, %v429, %v1476
    %v1644 = vsel %vm273, %v434, %v1478
    %v1645 = vsel %vm273, %v439, %v1480
    %v1646 = vsel %vm273, %v444, %v1482
    %v1647 = vsel %vm273, %v449, %v1484
    %v1648 = vsel %vm273, %v454, %v1486
    %v1649 = vsel %vm273, %v459, %v1488
    %v1650 = vsel %vm273, %v464, %v1490
    %vm1651 = vcmask 523264
    %v1652 = vsel %vm1651, %v1635, %v1524
    %v1653 = vsel %vm1651, %v1636, %v1526
    %v1654 = vsel %vm1651, %v1637, %v1528
    %v1655 = vsel %vm1651, %v1638, %v1530
    %v1656 = vsel %vm1651, %v1639, %v1532
    %v1657 = vsel %vm1651, %v1640, %v1534
    %v1658 = vsel %vm1651, %v1641, %v1536
    %v1659 = vsel %vm1651, %v1642, %v1538
    %v1660 = vsel %vm1651, %v1643, %v1540
    %v1661 = vsel %vm1651, %v1644, %v1542
    %v1662 = vsel %vm1651, %v1645, %v1544
    %v1663 = vsel %vm1651, %v1646, %v1546
    %v1664 = vsel %vm1651, %v1647, %v1548
    %v1665 = vsel %vm1651, %v1648, %v1550
    %v1666 = vsel %vm1651, %v1649, %v1552
    %v1667 = vsel %vm1651, %v1650, %v1554
    %vm1668 = vcmask 588800
    %v1669 = vsel %vm1668, %v1652, %v1588
    %v1670 = vsel %vm1668, %v1653, %v1590
    %v1671 = vsel %vm1668, %v1654, %v1592
    %v1672 = vsel %vm1668, %v1655, %v1594
    %v1673 = vsel %vm1668, %v1656, %v1596
    %v1674 = vsel %vm1668, %v1657, %v1598
    %v1675 = vsel %vm1668, %v1658, %v1600
    %v1676 = vsel %vm1668, %v1659, %v1602
    %v1677 = vsel %vm1668, %v1660, %v1604
    %v1678 = vsel %vm1668, %v1661, %v1606
    %v1679 = vsel %vm1668, %v1662, %v1608
    %v1680 = vsel %vm1668, %v1663, %v1610
    %v1681 = vsel %vm1668, %v1664, %v1612
    %v1682 = vsel %vm1668, %v1665, %v1614
    %v1683 = vsel %vm1668, %v1666, %v1616
    %v1684 = vsel %vm1668, %v1667, %v1618
    %vm1685 = vcmask 850944
    %1686 = vst.msk [vmem:[%s10] sm:$0xff] %vm1685, %v1669
    %1687 = vst.msk [vmem:[%s10 + $0x8] sm:$0xff] %vm1685, %v1670
    %1688 = vst.msk [vmem:[%s10 + $0x10] sm:$0xff] %vm1685, %v1671
    %1689 = vst.msk [vmem:[%s10 + $0x18] sm:$0xff] %vm1685, %v1672
    %1690 = vst.msk [vmem:[%s10 + $0x20] sm:$0xff] %vm1685, %v1673
    %1691 = vst.msk [vmem:[%s10 + $0x28] sm:$0xff] %vm1685, %v1674
    %1692 = vst.msk [vmem:[%s10 + $0x30] sm:$0xff] %vm1685, %v1675
    %1693 = vst.msk [vmem:[%s10 + $0x38] sm:$0xff] %vm1685, %v1676
    %1694 = vst.msk [vmem:[%s10 + $0x40] sm:$0xff] %vm1685, %v1677
    %1695 = vst.msk [vmem:[%s10 + $0x48] sm:$0xff] %vm1685, %v1678
    %1696 = vst.msk [vmem:[%s10 + $0x50] sm:$0xff] %vm1685, %v1679
    %1697 = vst.msk [vmem:[%s10 + $0x58] sm:$0xff] %vm1685, %v1680
    %1698 = vst.msk [vmem:[%s10 + $0x60] sm:$0xff] %vm1685, %v1681
    %1699 = vst.msk [vmem:[%s10 + $0x68] sm:$0xff] %vm1685, %v1682
    %1700 = vst.msk [vmem:[%s10 + $0x70] sm:$0xff] %vm1685, %v1683
    %1701 = vst.msk [vmem:[%s10 + $0x78] sm:$0xff] %vm1685, %v1684
    %v1702 = vpack.c.bf16 %v1670, %v1669
    %v1703 = vpack.c.bf16 %v1672, %v1671
    %v1704 = vpack.c.bf16 %v1674, %v1673
    %v1705 = vpack.c.bf16 %v1676, %v1675
    %v1706 = vpack.c.bf16 %v1678, %v1677
    %v1707 = vpack.c.bf16 %v1680, %v1679
    %v1708 = vpack.c.bf16 %v1682, %v1681
    %v1709 = vpack.c.bf16 %v1684, %v1683
    %v1710 = vld [vmem:[%s6] sm:$0xff]
    %v1711 = vld [vmem:[%s6 + $0x8] sm:$0xff]
    %v1712 = vld [vmem:[%s6 + $0x10] sm:$0xff]
    %v1713 = vld [vmem:[%s6 + $0x18] sm:$0xff]
    %v1714 = vld [vmem:[%s6 + $0x20] sm:$0xff]
    %v1715 = vld [vmem:[%s6 + $0x28] sm:$0xff]
    %v1716 = vld [vmem:[%s6 + $0x30] sm:$0xff]
    %v1717 = vld [vmem:[%s6 + $0x38] sm:$0xff]
    %v1718 = vld [vmem:[%s6 + $0x40] sm:$0xff]
    %v1719 = vld [vmem:[%s6 + $0x48] sm:$0xff]
    %v1720 = vld [vmem:[%s6 + $0x50] sm:$0xff]
    %v1721 = vld [vmem:[%s6 + $0x58] sm:$0xff]
    %v1722 = vld [vmem:[%s6 + $0x60] sm:$0xff]
    %v1723 = vpack.c.bf16 %v1711, %v1710
    %v1724 = vpack.c.bf16 %v1713, %v1712
    %v1725 = vpack.c.bf16 %v1715, %v1714
    %v1726 = vpack.c.bf16 %v1717, %v1716
    %v1727 = vpack.c.bf16 %v1719, %v1718
    %v1728 = vpack.c.bf16 %v1721, %v1720
    %v1729 = vpack.c.bf16 %v1722, %v1722
    %v1730 = vld [vmem:[%s7] sm:$0x1]
    %v1732 = vlaneseq
    %v1733 = vshrl.u32 %v1732, 7
    %v1734 = vsub.s32 0, %v1733
    %v1735 = vrot.slane %v1730, %v1734
    %v1738 = vsel %vm1685, %v1702, 0
    %v1741 = vsel %vm1685, %v1703, 0
    %v1744 = vsel %vm1685, %v1704, 0
    %v1747 = vsel %vm1685, %v1705, 0
    %v1750 = vsel %vm1685, %v1706, 0
    %v1753 = vsel %vm1685, %v1707, 0
    %v1756 = vsel %vm1685, %v1708, 0
    %v1759 = vsel %vm1685, %v1709, 0
    %v1762 = vsel %vm822, %v1729, 0
    %1764 = vmatprep.subr.bf16.mxu0 0
    %1765 = vmatpush1.bf16.msra.mxu0 0
    %1766 = vmatprep.subr.bf16.mxu0 0
    %1767 = vmatpush1.bf16.msra.mxu0 %v1762
    %1768 = vmatprep.subr.bf16.mxu0 0
    %1769 = vmatpush1.bf16.msra.mxu0 %v1728
    %1770 = vmatprep.subr.bf16.mxu0 0
    %1771 = vmatpush1.bf16.msra.mxu0 %v1727
    %1772 = vmatprep.subr.bf16.mxu0 0
    %1773 = vmatpush1.bf16.msra.mxu0 %v1726
    %1774 = vmatprep.subr.bf16.mxu0 0
    %1775 = vmatpush1.bf16.msra.mxu0 %v1725
    %1776 = vmatprep.subr.bf16.mxu0 0
    %1777 = vmatpush1.bf16.msra.mxu0 %v1724
    %1778 = vmatprep.subr.bf16.mxu0 0
    %1779 = vmatpush1.bf16.msra.mxu0 %v1723
    %1780 = vmatprep.subr.bf16.mxu0 0
    %1781 = vmatpush2.bf16.msra.mxu0 0
    %1782 = vmatprep.subr.bf16.mxu0 0
    %1783 = vmatpush2.bf16.msra.mxu0 0
    %1784 = vmatprep.subr.bf16.mxu0 0
    %1785 = vmatpush2.bf16.msra.mxu0 0
    %1786 = vmatprep.subr.bf16.mxu0 0
    %1787 = vmatpush2.bf16.msra.mxu0 0
    %1788 = vmatprep.subr.bf16.mxu0 0
    %1789 = vmatpush2.bf16.msra.mxu0 0
    %1790 = vmatprep.subr.bf16.mxu0 0
    %1791 = vmatpush2.bf16.msra.mxu0 0
    %1792 = vmatprep.subr.bf16.mxu0 0
    %1793 = vmatpush2.bf16.msra.mxu0 0
    %1794 = vmatprep.subr.bf16.mxu0 0
    %1795 = vmatpush2.bf16.msra.mxu0 0
    %1796 = vmatprep.mubr.bf16.mxu0 0
    %1797 = vmatmul.mubr.bf16.gmra.mxu0 %v1738
    %v1798 = vpop.f32.mrf.mxu0
    %v1799 = vadd.f32 %v1735, %v1798
    %v1800 = vpop.f32.mrf.mxu0
    %v1801 = vpop.f32.mrf.mxu0
    %v1802 = vadd.f32 %v1735, %v1801
    %v1803 = vpop.f32.mrf.mxu0
    %1804 = vmatprep.mubr.bf16.mxu0 0
    %1805 = vmatmul.mubr.bf16.gmra.mxu0 %v1741
    %v1806 = vpop.f32.mrf.mxu0
    %v1807 = vadd.f32 %v1735, %v1806
    %v1808 = vpop.f32.mrf.mxu0
    %v1809 = vpop.f32.mrf.mxu0
    %v1810 = vadd.f32 %v1735, %v1809
    %v1811 = vpop.f32.mrf.mxu0
    %1812 = vmatprep.mubr.bf16.mxu0 0
    %1813 = vmatmul.mubr.bf16.gmra.mxu0 %v1744
    %v1814 = vpop.f32.mrf.mxu0
    %v1815 = vadd.f32 %v1735, %v1814
    %v1816 = vpop.f32.mrf.mxu0
    %v1817 = vpop.f32.mrf.mxu0
    %v1818 = vadd.f32 %v1735, %v1817
    %v1819 = vpop.f32.mrf.mxu0
    %1820 = vmatprep.mubr.bf16.mxu0 0
    %1821 = vmatmul.mubr.bf16.gmra.mxu0 %v1747
    %v1822 = vpop.f32.mrf.mxu0
    %v1823 = vadd.f32 %v1735, %v1822
    %v1824 = vpop.f32.mrf.mxu0
    %v1825 = vpop.f32.mrf.mxu0
    %v1826 = vadd.f32 %v1735, %v1825
    %v1827 = vpop.f32.mrf.mxu0
    %1828 = vmatprep.mubr.bf16.mxu0 0
    %1829 = vmatmul.mubr.bf16.gmra.mxu0 %v1750
    %v1830 = vpop.f32.mrf.mxu0
    %v1831 = vadd.f32 %v1735, %v1830
    %v1832 = vpop.f32.mrf.mxu0
    %v1833 = vpop.f32.mrf.mxu0
    %v1834 = vadd.f32 %v1735, %v1833
    %v1835 = vpop.f32.mrf.mxu0
    %1836 = vmatprep.mubr.bf16.mxu0 0
    %1837 = vmatmul.mubr.bf16.gmra.mxu0 %v1753
    %v1838 = vpop.f32.mrf.mxu0
    %v1839 = vadd.f32 %v1735, %v1838
    %v1840 = vpop.f32.mrf.mxu0
    %v1841 = vpop.f32.mrf.mxu0
    %v1842 = vadd.f32 %v1735, %v1841
    %v1843 = vpop.f32.mrf.mxu0
    %1844 = vmatprep.mubr.bf16.mxu0 0
    %1845 = vmatmul.mubr.bf16.gmra.mxu0 %v1756
    %v1846 = vpop.f32.mrf.mxu0
    %v1847 = vadd.f32 %v1735, %v1846
    %v1848 = vpop.f32.mrf.mxu0
    %v1849 = vpop.f32.mrf.mxu0
    %v1850 = vadd.f32 %v1735, %v1849
    %v1851 = vpop.f32.mrf.mxu0
    %1852 = vmatprep.mubr.bf16.mxu0 0
    %1853 = vmatmul.mubr.bf16.gmra.mxu0 %v1759
    %v1854 = vpop.f32.mrf.mxu0
    %v1855 = vadd.f32 %v1735, %v1854
    %v1856 = vpop.f32.mrf.mxu0
    %v1857 = vpop.f32.mrf.mxu0
    %v1858 = vadd.f32 %v1735, %v1857
    %v1859 = vpop.f32.mrf.mxu0
    %1860 = vdwg.mxu0
    %v1861 = vmax.f32 %v1799, 0.0
    %v1862 = vmax.f32 %v1802, 0.0
    %v1863 = vmax.f32 %v1807, 0.0
    %v1864 = vmax.f32 %v1810, 0.0
    %v1865 = vmax.f32 %v1815, 0.0
    %v1866 = vmax.f32 %v1818, 0.0
    %v1867 = vmax.f32 %v1823, 0.0
    %v1868 = vmax.f32 %v1826, 0.0
    %v1869 = vmax.f32 %v1831, 0.0
    %v1870 = vmax.f32 %v1834, 0.0
    %v1871 = vmax.f32 %v1839, 0.0
    %v1872 = vmax.f32 %v1842, 0.0
    %v1873 = vmax.f32 %v1847, 0.0
    %v1874 = vmax.f32 %v1850, 0.0
    %v1875 = vmax.f32 %v1855, 0.0
    %v1876 = vmax.f32 %v1858, 0.0
    %v1877 = vld [vmem:[%s8] sm:$0xff]
    %v1878 = vld [vmem:[%s8 + $0x8] sm:$0xff]
    %v1879 = vld [vmem:[%s8 + $0x10] sm:$0xff]
    %v1880 = vld [vmem:[%s8 + $0x18] sm:$0xff]
    %v1881 = vld [vmem:[%s8 + $0x20] sm:$0xff]
    %v1882 = vld [vmem:[%s8 + $0x28] sm:$0xff]
    %v1883 = vld [vmem:[%s8 + $0x30] sm:$0xff]
    %v1884 = vld [vmem:[%s8 + $0x38] sm:$0xff]
    %v1885 = vpack.c.bf16 %v1878, %v1877
    %v1886 = vpack.c.bf16 %v1880, %v1879
    %v1887 = vpack.c.bf16 %v1882, %v1881
    %v1888 = vpack.c.bf16 %v1884, %v1883
    %v1889 = vpack.c.bf16 %v1862, %v1861
    %v1890 = vpack.c.bf16 %v1864, %v1863
    %v1891 = vpack.c.bf16 %v1866, %v1865
    %v1892 = vpack.c.bf16 %v1868, %v1867
    %v1893 = vpack.c.bf16 %v1870, %v1869
    %v1894 = vpack.c.bf16 %v1872, %v1871
    %v1895 = vpack.c.bf16 %v1874, %v1873
    %v1896 = vpack.c.bf16 %v1876, %v1875
    %v1897 = vld [vmem:[#allocation3] sm:$0x1]
    %1899 = vset.pattern.permute.xlu0 0
    %1900 = vperm.xlu0 %1899, %v1897
    %v1901 = vpop.permute.xlu0 %1900
    %v1903 = vlaneseq
    %v1904 = vshrl.u32 %v1903, 7
    %v1905 = vsub.s32 0, %v1904
    %v1906 = vrot.slane %v1901, %v1905
    %1907 = vxpose.xlu0.c.b16.start [1/8] %v1885, 128
    %1908 = vxpose.xlu0.c.b16.cont [2/8] %v1886, 128
    %1909 = vxpose.xlu0.c.b16.cont [3/8] %v1887, 128
    %1910 = vxpose.xlu0.c.b16.cont [4/8] %v1888, 128
    %1911 = vxpose.xlu0.c.b16.cont [5/8] 0, 128
    %1912 = vxpose.xlu0.c.b16.cont [6/8] 0, 128
    %1913 = vxpose.xlu0.c.b16.cont [7/8] 0, 128
    %1914 = vxpose.xlu0.c.b16.end [8/8] 0, 128
    %v1915 = vpop.trf.xlu0
    %v1916 = vpop.trf.xlu0
    %v1917 = vpop.trf.xlu0
    %v1918 = vpop.trf.xlu0
    %v1919 = vpop.trf.xlu0
    %v1920 = vpop.trf.xlu0
    %v1921 = vpop.trf.xlu0
    %v1922 = vpop.trf.xlu0
    %v1924 = vsel %vm1651, %v1915, 0
    %v1927 = vsel %vm1651, %v1889, 0
    %v1930 = vsel %vm1651, %v1890, 0
    %v1933 = vsel %vm1651, %v1891, 0
    %v1936 = vsel %vm1651, %v1892, 0
    %v1939 = vsel %vm1651, %v1893, 0
    %v1942 = vsel %vm1651, %v1894, 0
    %v1945 = vsel %vm1651, %v1895, 0
    %v1948 = vsel %vm1651, %v1896, 0
    %1950 = vmatprep.subr.bf16.mxu0 0
    %1951 = vmatpush1.bf16.xpose.msra.mxu0 %v1948
    %1952 = vmatprep.subr.bf16.mxu0 0
    %1953 = vmatpush1.bf16.xpose.msra.mxu0 %v1945
    %1954 = vmatprep.subr.bf16.mxu0 0
    %1955 = vmatpush1.bf16.xpose.msra.mxu0 %v1942
    %1956 = vmatprep.subr.bf16.mxu0 0
    %1957 = vmatpush1.bf16.xpose.msra.mxu0 %v1939
    %1958 = vmatprep.subr.bf16.mxu0 0
    %1959 = vmatpush1.bf16.xpose.msra.mxu0 %v1936
    %1960 = vmatprep.subr.bf16.mxu0 0
    %1961 = vmatpush1.bf16.xpose.msra.mxu0 %v1933
    %1962 = vmatprep.subr.bf16.mxu0 0
    %1963 = vmatpush1.bf16.xpose.msra.mxu0 %v1930
    %1964 = vmatprep.subr.bf16.mxu0 0
    %1965 = vmatpush1.bf16.xpose.msra.mxu0 %v1927
    %1966 = vmatprep.subr.bf16.mxu0 0
    %1967 = vmatpush2.bf16.xpose.msra.mxu0 0
    %1968 = vmatprep.subr.bf16.mxu0 0
    %1969 = vmatpush2.bf16.xpose.msra.mxu0 0
    %1970 = vmatprep.subr.bf16.mxu0 0
    %1971 = vmatpush2.bf16.xpose.msra.mxu0 0
    %1972 = vmatprep.subr.bf16.mxu0 0
    %1973 = vmatpush2.bf16.xpose.msra.mxu0 0
    %1974 = vmatprep.subr.bf16.mxu0 0
    %1975 = vmatpush2.bf16.xpose.msra.mxu0 0
    %1976 = vmatprep.subr.bf16.mxu0 0
    %1977 = vmatpush2.bf16.xpose.msra.mxu0 0
    %1978 = vmatprep.subr.bf16.mxu0 0
    %1979 = vmatpush2.bf16.xpose.msra.mxu0 0
    %1980 = vmatprep.subr.bf16.mxu0 0
    %1981 = vmatpush2.bf16.xpose.msra.mxu0 0
    %1982 = vmatprep.mubr.bf16.mxu0 0
    %1983 = vmatmul.mubr.bf16.gmra.mxu0 %v1924
    %v1984 = vpop.f32.mrf.mxu0
    %v1985 = vadd.f32 %v1906, %v1984
    %v1986 = vpop.f32.mrf.mxu0
    %v1987 = vpop.f32.mrf.mxu0
    %v1988 = vpop.f32.mrf.mxu0
    %1989 = vdwg.mxu0
    %1990 = vst [vmem:[#allocation4] sm:$0x1] %v1985
    // Predicated region
    $region42: #{tpu_custom_call.1} parent=1 // pred_check
      _
    $region43: #{tpu_custom_call.1} parent=1 // pred_check_branch
      %1992 = sbr.rel (0) target = $region45
    $region44: #{tpu_custom_call.1} parent=1 // pred_region
      _
    $region45: #{tpu_custom_call.1} parent=1 // pred_fallthru
      _
    // Predicated region
    $region46: #{tpu_custom_call.1} parent=1 // pred_check
      _
    $region47: #{tpu_custom_call.1} parent=1 // pred_check_branch
      %1994 = sbr.rel (0) target = $region49
    $region48: #{tpu_custom_call.1} parent=1 // pred_region
      %s1996 = ssub.s32 16, 16
      %1997 = vsyncadd [#allocation5], %s1996
      %s1999 = sshll.u32 [#allocation4], 4
      %s2000 = int_to_ptr.vmem [resolvable:$true] %s1999
      %2002 = dma.vmem_to_hbm [thread:$0]  %s2000, 16, %s11, [#allocation5]
    $region49: #{tpu_custom_call.1} parent=1 // pred_fallthru
      _
    // Predicated region
    $region50: #{tpu_custom_call.1} parent=1 // pred_check
      _
    $region51: #{tpu_custom_call.1} parent=1 // pred_check_branch
      %2004 = sbr.rel (0) target = $region53
    $region52: #{tpu_custom_call.1} parent=1 // pred_region
      _
    $region53: #{tpu_custom_call.1} parent=1 // pred_fallthru
      _
    // Predicated region
    $region54: #{tpu_custom_call.1} parent=1 // pred_check
      _
    $region55: #{tpu_custom_call.1} parent=1 // pred_check_branch
      %2006 = sbr.rel (0) target = $region57
    $region56: #{tpu_custom_call.1} parent=1 // pred_region
      %2007 = dma.done [#allocation5], 16
    $region57: #{tpu_custom_call.1} parent=1 // pred_fallthru
      _
    %2008 = vsyncpa [#allocation5], 1

</llo_original>
